<compile_context>
chip_gen: v5e
topology: v5e:2x2
jax: 0.10.0
libtpu: 0.0.40
codegen_flags: <defaults>
</compile_context>

<pallas_src>
import functools
import math

import jax
import jax.numpy as jnp
from jax import lax
from jax.experimental import pallas as pl
from jax.experimental.pallas import tpu as pltpu


def _layer_norm(x, gamma, beta, eps):
    mean = jnp.mean(x, axis=-1, keepdims=True)
    var = jnp.mean((x - mean) ** 2, axis=-1, keepdims=True)
    return (x - mean) * lax.rsqrt(var + eps) * gamma + beta


def _gelu_erf(x):
    # recbole gelu: x * 0.5 * (1 + erf(x / sqrt(2)))
    return x * 0.5 * (1.0 + lax.erf(x / jnp.sqrt(jnp.float32(2.0))))


# --------------------------------------------------------------------------------------
# Fused encoder kernel: single invocation, all layers unrolled, everything VMEM-resident.
# --------------------------------------------------------------------------------------
def _nova_encoder_kernel(h0_ref, mix_ref, mask_ref,
                         wqk_ref, bqk_ref, wv_ref, bv_ref,
                         wd_ref, bd_ref, ln1g_ref, ln1b_ref,
                         w1_ref, b1_ref, w2_ref, b2_ref, ln2g_ref, ln2b_ref,
                         out_ref,
                         *, n_layers, batch, seq_len, hidden, n_heads, head_size, eps,
                         output_all_encoded_layers):
    h = h0_ref[...].astype(jnp.float32)        # (B*L, H) hidden state, lives in vregs/VMEM
    mix = mix_ref[...]                          # (B*L, H) layer-invariant (attr.sum + pos)
    mask = mask_ref[...]                        # (1 or B, L, L) additive mask, loaded once

    for l in range(n_layers):                   # static unroll — no grid-step overhead
        mixed = mix + h                         # fusion_type='sum'
        mx_bf = mixed.astype(jnp.bfloat16)
        h_bf = h.astype(jnp.bfloat16)

        # Fused Q|K projection (lane-dense, N=2H); scale 1/sqrt(hd) folded into wq/bq.
        qk = jnp.dot(mx_bf, wqk_ref[l], preferred_element_type=jnp.float32) + bqk_ref[l]
        v = jnp.dot(h_bf, wv_ref[l], preferred_element_type=jnp.float32) + bv_ref[l]

        qk_bf = qk.astype(jnp.bfloat16).reshape(batch, seq_len, 2 * hidden)  # single cast
        v_bf = v.astype(jnp.bfloat16).reshape(batch, seq_len, hidden)

        # Attention per head (3-D einsums batched over B); contexts concat back to (B*L, H).
        ctx_heads = []
        for hh in range(n_heads):
            qh = qk_bf[:, :, hh * head_size:(hh + 1) * head_size]
            kh = qk_bf[:, :, hidden + hh * head_size: hidden + (hh + 1) * head_size]
            vh = v_bf[:, :, hh * head_size:(hh + 1) * head_size]

            s = jnp.einsum("bqd,bkd->bqk", qh, kh,
                           preferred_element_type=jnp.float32) + mask
            s = s - jnp.max(s, axis=-1, keepdims=True)
            p = jnp.exp(s)
            p = p * pl.reciprocal(jnp.sum(p, axis=-1, keepdims=True), approx=True)

            ctx_heads.append(jnp.einsum("bqk,bkd->bqd", p.astype(jnp.bfloat16), vh,
                                        preferred_element_type=jnp.float32))

        ctx = jnp.concatenate(ctx_heads, axis=-1).reshape(batch * seq_len, hidden)
        attn_out = jnp.dot(ctx.astype(jnp.bfloat16), wd_ref[l],
                           preferred_element_type=jnp.float32) + bd_ref[l]
        attn_out = _layer_norm(attn_out + h, ln1g_ref[l], ln1b_ref[l], eps)

        inter = jnp.dot(attn_out.astype(jnp.bfloat16), w1_ref[l],
                        preferred_element_type=jnp.float32) + b1_ref[l]
        inter = _gelu_erf(inter)
        ff = jnp.dot(inter.astype(jnp.bfloat16), w2_ref[l],
                     preferred_element_type=jnp.float32) + b2_ref[l]
        h = _layer_norm(ff + attn_out, ln2g_ref[l], ln2b_ref[l], eps)

        if output_all_encoded_layers:
            out_ref[l] = h.astype(out_ref.dtype)

    if not output_all_encoded_layers:
        out_ref[0] = h.astype(out_ref.dtype)


def nova_transformer_encoder(hidden, attribute_list, pos, mask, layer_params,
                             *, n_heads, eps=1e-12, output_all_encoded_layers=True,
                             mask_batch_invariant=True):
    B, L, H = hidden.shape
    NL = len(layer_params)
    hd = H // n_heads
    scale = 1.0 / math.sqrt(hd)
    inner = layer_params[0]["w1"].shape[-1]

    # ---- layer-invariant prologue hoisted out of the kernel (plain JAX, runs once) ----
    attr = jnp.concatenate(attribute_list, axis=-2)       # (B, L, F, H)
    mixed_base = jnp.sum(attr, axis=-2) + pos              # fusion_type='sum' invariant part
    h0 = hidden.reshape(B * L, H).astype(jnp.float32)      # fold B into matmul rows
    mx = mixed_base.reshape(B * L, H).astype(jnp.float32)
    if mask_batch_invariant:
        # recbole causal mask is identical across the batch -> ship a single (1, L, L) slab
        msk = mask[:1].reshape(1, L, L).astype(jnp.float32)
    else:
        # TODO(synk): per-item padding masks need the full (B, L, L) path.
        msk = mask.reshape(B, L, L).astype(jnp.float32)

    # ---- stack per-layer weights; fuse Q|K and fold the attention scale (wrapper-side) ----
    def stk(name):
        return jnp.stack([p[name] for p in layer_params])

    wqk = jnp.concatenate([stk("wq") * scale, stk("wk")], axis=-1).astype(jnp.bfloat16)
    bqk = jnp.concatenate([stk("bq") * scale, stk("bk")], axis=-1)          # (NL, 1, 2H)
    wv = stk("wv").astype(jnp.bfloat16)
    bv = stk("bv")
    wd = stk("wd").astype(jnp.bfloat16)
    bd = stk("bd")
    ln1g, ln1b = stk("ln1_g"), stk("ln1_b")
    w1 = stk("w1").astype(jnp.bfloat16)
    b1 = stk("b1")
    w2 = stk("w2").astype(jnp.bfloat16)
    b2 = stk("b2")
    ln2g, ln2b = stk("ln2_g"), stk("ln2_b")

    weight_arrays = [wqk, bqk, wv, bv, wd, bd, ln1g, ln1b, w1, b1, w2, b2, ln2g, ln2b]
    NL_out = NL if output_all_encoded_layers else 1

    # ---- explicit scoped-VMEM budget: residents + rough f32 working set, with headroom ----
    def nbytes(a):
        return a.size * a.dtype.itemsize

    resident = sum(nbytes(a) for a in [h0, mx, msk] + weight_arrays)
    resident += NL_out * B * L * H * jnp.dtype(hidden.dtype).itemsize        # output slab
    work = 4 * (B * L) * (5 * H + inner) + 4 * B * L * L * 2                 # f32 activations
    vmem_limit = int(min(64 << 20, max(16 << 20, 2 * (resident + work))))

    kernel = functools.partial(_nova_encoder_kernel, n_layers=NL, batch=B, seq_len=L,
                               hidden=H, n_heads=n_heads, head_size=hd, eps=eps,
                               output_all_encoded_layers=output_all_encoded_layers)

    # No grid: default BlockSpecs map every operand whole into VMEM (single invocation).
    all_out = pl.pallas_call(
        kernel,
        out_shape=jax.ShapeDtypeStruct((NL_out, B * L, H), hidden.dtype),
        compiler_params=pltpu.CompilerParams(vmem_limit_bytes=vmem_limit),
    )(h0, mx, msk, *weight_arrays)

    all_out = all_out.reshape(NL_out, B, L, H)
    return [all_out[i] for i in range(NL_out)]


# --------------------------------------------------------------------------------------
# Pure-JAX f32 reference (for correctness check)
# --------------------------------------------------------------------------------------
def _ref_layer(hidden, attr, pos, mask, p, n_heads, eps=1e-12):
    B, L, H = hidden.shape
    hd = H // n_heads
    mixed = attr.sum(axis=-2) + hidden + pos
    q = mixed @ p["wq"] + p["bq"][0]
    k = mixed @ p["wk"] + p["bk"][0]
    v = hidden @ p["wv"] + p["bv"][0]

    def split(x):
        return x.reshape(B, L, n_heads, hd).transpose(0, 2, 1, 3)

    qh, kh, vh = split(q), split(k), split(v)
    scores = jnp.einsum("bhqd,bhkd->bhqk", qh, kh) / math.sqrt(hd) + mask
    probs = jax.nn.softmax(scores, axis=-1)
    ctx = jnp.einsum("bhqk,bhkd->bhqd", probs, vh).transpose(0, 2, 1, 3).reshape(B, L, H)
    attn_out = ctx @ p["wd"] + p["bd"][0]

    def ln(x, g, b):
        m = x.mean(-1, keepdims=True)
        var = ((x - m) ** 2).mean(-1, keepdims=True)
        return (x - m) / jnp.sqrt(var + eps) * g[0] + b[0]

    attn_out = ln(attn_out + hidden, p["ln1_g"], p["ln1_b"])
    inter = attn_out @ p["w1"] + p["b1"][0]
    inter = inter * 0.5 * (1.0 + lax.erf(inter / jnp.sqrt(2.0)))
    ff = inter @ p["w2"] + p["b2"][0]
    return ln(ff + attn_out, p["ln2_g"], p["ln2_b"])


# --------------------------------------------------------------------------------------
# Deterministic parameter init + driver
# --------------------------------------------------------------------------------------
def init_layer_params(key, H, I):
    ks = jax.random.split(key, 6)
    scale = 0.02
    return {
        "wq": jax.random.normal(ks[0], (H, H), jnp.float32) * scale,
        "bq": jnp.zeros((1, H), jnp.float32),
        "wk": jax.random.normal(ks[1], (H, H), jnp.float32) * scale,
        "bk": jnp.zeros((1, H), jnp.float32),
        "wv": jax.random.normal(ks[2], (H, H), jnp.float32) * scale,
        "bv": jnp.zeros((1, H), jnp.float32),
        "wd": jax.random.normal(ks[3], (H, H), jnp.float32) * scale,
        "bd": jnp.zeros((1, H), jnp.float32),
        "ln1_g": jnp.ones((1, H), jnp.float32),
        "ln1_b": jnp.zeros((1, H), jnp.float32),
        "w1": jax.random.normal(ks[4], (H, I), jnp.float32) * scale,
        "b1": jnp.zeros((1, I), jnp.float32),
        "w2": jax.random.normal(ks[5], (I, H), jnp.float32) * scale,
        "b2": jnp.zeros((1, H), jnp.float32),
        "ln2_g": jnp.ones((1, H), jnp.float32),
        "ln2_b": jnp.zeros((1, H), jnp.float32),
    }


if __name__ == "__main__":
    # Module defaults: n_layers=2, n_heads=2, hidden_size=64, attribute_hidden_size=[64],
    # feat_num=1, inner_size=256, fusion_type='sum', layer_norm_eps=1e-12.
    B, L, H, I = 2, 8, 64, 256
    N_LAYERS, N_HEADS, FEAT_NUM = 2, 2, 1
    EPS = 1e-12

    key = jax.random.PRNGKey(0)
    k_h, k_a, k_p, k_w = jax.random.split(key, 4)

    hidden = jax.random.normal(k_h, (B, L, H), jnp.float32)
    attribute_hidden_states = [jax.random.normal(k_a, (B, L, FEAT_NUM, H), jnp.float32)]
    position_embedding = jax.random.normal(k_p, (B, L, H), jnp.float32)

    # causal extended attention mask, recbole-style: (1 - tril) * -10000, shape [B,1,L,L]
    tril = jnp.tril(jnp.ones((L, L), jnp.float32))
    attention_mask = ((1.0 - tril) * -10000.0)[None, None].repeat(B, axis=0)

    layer_params = [init_layer_params(k, H, I) for k in jax.random.split(k_w, N_LAYERS)]

    # TODO(synk): fusion_type 'concat' and 'gate' branches not implemented (default 'sum' only).
    outs = nova_transformer_encoder(hidden, attribute_hidden_states, position_embedding,
                                    attention_mask, layer_params,
                                    n_heads=N_HEADS, eps=EPS,
                                    output_all_encoded_layers=True)
    outs = [jax.block_until_ready(o) for o in outs]

    # also exercise the final-layer-only output path
    out_last = nova_transformer_encoder(hidden, attribute_hidden_states, position_embedding,
                                        attention_mask, layer_params,
                                        n_heads=N_HEADS, eps=EPS,
                                        output_all_encoded_layers=False)
    out_last = [jax.block_until_ready(o) for o in out_last]

    # correctness check vs pure-JAX f32 reference (kernel uses bf16 MXU operands -> loose tol)
    attr_cat = jnp.concatenate(attribute_hidden_states, axis=-2)
    ref = hidden
    for i, p in enumerate(layer_params):
        ref = _ref_layer(ref, attr_cat, position_embedding, attention_mask, p, N_HEADS, EPS)
        assert outs[i].shape == (B, L, H)
        assert jnp.allclose(outs[i], ref, rtol=3e-2, atol=3e-2), f"mismatch at layer {i}"
    ref = jax.block_until_ready(ref)

    assert out_last[-1].shape == (B, L, H)
    assert jnp.allclose(out_last[-1], ref, rtol=3e-2, atol=3e-2), "mismatch (last-only path)"
    print("KERNEL_OK")
</pallas_src>

<mosaic_0001>
module attributes {stable_mosaic.version = 11 : i64} {
  func.func @_nova_encoder_kernel(%arg0: memref<16x64xf32, #tpu.memory_space<vmem>>, %arg1: memref<16x64xf32, #tpu.memory_space<vmem>>, %arg2: memref<1x8x8xf32, #tpu.memory_space<vmem>>, %arg3: memref<2x64x128xbf16, #tpu.memory_space<vmem>>, %arg4: memref<2x1x128xf32, #tpu.memory_space<vmem>>, %arg5: memref<2x64x64xbf16, #tpu.memory_space<vmem>>, %arg6: memref<2x1x64xf32, #tpu.memory_space<vmem>>, %arg7: memref<2x64x64xbf16, #tpu.memory_space<vmem>>, %arg8: memref<2x1x64xf32, #tpu.memory_space<vmem>>, %arg9: memref<2x1x64xf32, #tpu.memory_space<vmem>>, %arg10: memref<2x1x64xf32, #tpu.memory_space<vmem>>, %arg11: memref<2x64x256xbf16, #tpu.memory_space<vmem>>, %arg12: memref<2x1x256xf32, #tpu.memory_space<vmem>>, %arg13: memref<2x256x64xbf16, #tpu.memory_space<vmem>>, %arg14: memref<2x1x64xf32, #tpu.memory_space<vmem>>, %arg15: memref<2x1x64xf32, #tpu.memory_space<vmem>>, %arg16: memref<2x1x64xf32, #tpu.memory_space<vmem>>, %arg17: memref<2x16x64xf32, #tpu.memory_space<vmem>>) attributes {dimension_semantics = [], scalar_prefetch = 0 : i64, scratch_operands = 0 : i64, tpu.core_type = #tpu.core_type<tc>} {
    %c0 = arith.constant 0 : index
    %c0_0 = arith.constant 0 : index
    %0 = vector.load %arg0[%c0, %c0_0] : memref<16x64xf32, #tpu.memory_space<vmem>>, vector<16x64xf32>
    %c0_1 = arith.constant 0 : index
    %c0_2 = arith.constant 0 : index
    %1 = vector.load %arg1[%c0_1, %c0_2] : memref<16x64xf32, #tpu.memory_space<vmem>>, vector<16x64xf32>
    %c0_3 = arith.constant 0 : index
    %c0_4 = arith.constant 0 : index
    %c0_5 = arith.constant 0 : index
    %2 = vector.load %arg2[%c0_3, %c0_4, %c0_5] : memref<1x8x8xf32, #tpu.memory_space<vmem>>, vector<1x8x8xf32>
    %3 = arith.addf %1, %0 : vector<16x64xf32>
    %4 = arith.truncf %3 : vector<16x64xf32> to vector<16x64xbf16>
    %5 = arith.truncf %0 : vector<16x64xf32> to vector<16x64xbf16>
    %c0_6 = arith.constant 0 : index
    %c0_7 = arith.constant 0 : index
    %c0_8 = arith.constant 0 : index
    %6 = vector.load %arg3[%c0_6, %c0_7, %c0_8] : memref<2x64x128xbf16, #tpu.memory_space<vmem>>, vector<1x64x128xbf16>
    %7 = vector.shape_cast %6 : vector<1x64x128xbf16> to vector<64x128xbf16>
    %cst = arith.constant dense<0.000000e+00> : vector<16x128xf32>
    %8 = tpu.matmul %4, %7, %cst {dimension_numbers = #tpu.dot_dimension_numbers<[1], [0], [0], [1], [0, 0, 1, 1], [], []>} : vector<16x64xbf16>, vector<64x128xbf16>, vector<16x128xf32> -> vector<16x128xf32>
    %c0_9 = arith.constant 0 : index
    %c0_10 = arith.constant 0 : index
    %c0_11 = arith.constant 0 : index
    %9 = vector.load %arg4[%c0_9, %c0_10, %c0_11] : memref<2x1x128xf32, #tpu.memory_space<vmem>>, vector<1x1x128xf32>
    %10 = vector.shape_cast %9 : vector<1x1x128xf32> to vector<1x128xf32>
    %11 = vector.broadcast %10 : vector<1x128xf32> to vector<16x128xf32>
    %12 = arith.addf %8, %11 : vector<16x128xf32>
    %c0_12 = arith.constant 0 : index
    %c0_13 = arith.constant 0 : index
    %c0_14 = arith.constant 0 : index
    %13 = vector.load %arg5[%c0_12, %c0_13, %c0_14] : memref<2x64x64xbf16, #tpu.memory_space<vmem>>, vector<1x64x64xbf16>
    %14 = vector.shape_cast %13 : vector<1x64x64xbf16> to vector<64x64xbf16>
    %cst_15 = arith.constant dense<0.000000e+00> : vector<16x64xf32>
    %15 = tpu.matmul %5, %14, %cst_15 {dimension_numbers = #tpu.dot_dimension_numbers<[1], [0], [0], [1], [0, 0, 1, 1], [], []>} : vector<16x64xbf16>, vector<64x64xbf16>, vector<16x64xf32> -> vector<16x64xf32>
    %c0_16 = arith.constant 0 : index
    %c0_17 = arith.constant 0 : index
    %c0_18 = arith.constant 0 : index
    %16 = vector.load %arg6[%c0_16, %c0_17, %c0_18] : memref<2x1x64xf32, #tpu.memory_space<vmem>>, vector<1x1x64xf32>
    %17 = vector.shape_cast %16 : vector<1x1x64xf32> to vector<1x64xf32>
    %18 = vector.broadcast %17 : vector<1x64xf32> to vector<16x64xf32>
    %19 = arith.addf %15, %18 : vector<16x64xf32>
    %20 = arith.truncf %12 : vector<16x128xf32> to vector<16x128xbf16>
    %21 = vector.shape_cast %20 : vector<16x128xbf16> to vector<2x8x128xbf16>
    %22 = arith.truncf %19 : vector<16x64xf32> to vector<16x64xbf16>
    %23 = vector.shape_cast %22 : vector<16x64xbf16> to vector<2x8x64xbf16>
    %24 = vector.extract_strided_slice %21 {offsets = [0, 0, 0], sizes = [2, 8, 32], strides = [1, 1, 1]} : vector<2x8x128xbf16> to vector<2x8x32xbf16>
    %25 = vector.extract_strided_slice %21 {offsets = [0, 0, 64], sizes = [2, 8, 32], strides = [1, 1, 1]} : vector<2x8x128xbf16> to vector<2x8x32xbf16>
    %26 = vector.extract_strided_slice %23 {offsets = [0, 0, 0], sizes = [2, 8, 32], strides = [1, 1, 1]} : vector<2x8x64xbf16> to vector<2x8x32xbf16>
    "tpu.trace_start"() <{level = 10 : i32, message = "bqd,bkd->bqk"}> : () -> ()
    %cst_19 = arith.constant dense<0.000000e+00> : vector<2x8x8xf32>
    %27 = tpu.matmul %24, %25, %cst_19 {dimension_numbers = #tpu.dot_dimension_numbers<[2], [2], [1], [1], [0, 0, 0, 1, 1, 1], [0], [0]>} : vector<2x8x32xbf16>, vector<2x8x32xbf16>, vector<2x8x8xf32> -> vector<2x8x8xf32>
    "tpu.trace_stop"() : () -> ()
    %28 = vector.broadcast %2 : vector<1x8x8xf32> to vector<2x8x8xf32>
    %29 = arith.addf %27, %28 : vector<2x8x8xf32>
    %cst_20 = arith.constant dense<0xFF800000> : vector<2x8xf32>
    %30 = vector.multi_reduction <maximumf>, %29, %cst_20 [2] : vector<2x8x8xf32> to vector<2x8xf32>
    %31 = vector.shape_cast %30 : vector<2x8xf32> to vector<2x8x1xf32>
    %32 = vector.broadcast %31 : vector<2x8x1xf32> to vector<2x8x8xf32>
    %33 = arith.subf %29, %32 : vector<2x8x8xf32>
    %34 = math.exp %33 : vector<2x8x8xf32>
    %cst_21 = arith.constant dense<0.000000e+00> : vector<2x8xf32>
    %35 = vector.multi_reduction <add>, %34, %cst_21 [2] : vector<2x8x8xf32> to vector<2x8xf32>
    %36 = vector.shape_cast %35 : vector<2x8xf32> to vector<2x8x1xf32>
    %37 = tpu.reciprocal %36 {approx = true} : vector<2x8x1xf32> -> vector<2x8x1xf32>
    %38 = vector.broadcast %37 : vector<2x8x1xf32> to vector<2x8x8xf32>
    %39 = arith.mulf %34, %38 : vector<2x8x8xf32>
    %40 = arith.truncf %39 : vector<2x8x8xf32> to vector<2x8x8xbf16>
    "tpu.trace_start"() <{level = 10 : i32, message = "bqk,bkd->bqd"}> : () -> ()
    %cst_22 = arith.constant dense<0.000000e+00> : vector<2x8x32xf32>
    %41 = tpu.matmul %40, %26, %cst_22 {dimension_numbers = #tpu.dot_dimension_numbers<[2], [1], [1], [2], [0, 0, 0, 1, 1, 2], [0], [0]>} : vector<2x8x8xbf16>, vector<2x8x32xbf16>, vector<2x8x32xf32> -> vector<2x8x32xf32>
    "tpu.trace_stop"() : () -> ()
    %42 = vector.extract_strided_slice %21 {offsets = [0, 0, 32], sizes = [2, 8, 32], strides = [1, 1, 1]} : vector<2x8x128xbf16> to vector<2x8x32xbf16>
    %43 = vector.extract_strided_slice %21 {offsets = [0, 0, 96], sizes = [2, 8, 32], strides = [1, 1, 1]} : vector<2x8x128xbf16> to vector<2x8x32xbf16>
    %44 = vector.extract_strided_slice %23 {offsets = [0, 0, 32], sizes = [2, 8, 32], strides = [1, 1, 1]} : vector<2x8x64xbf16> to vector<2x8x32xbf16>
    "tpu.trace_start"() <{level = 10 : i32, message = "bqd,bkd->bqk"}> : () -> ()
    %cst_23 = arith.constant dense<0.000000e+00> : vector<2x8x8xf32>
    %45 = tpu.matmul %42, %43, %cst_23 {dimension_numbers = #tpu.dot_dimension_numbers<[2], [2], [1], [1], [0, 0, 0, 1, 1, 1], [0], [0]>} : vector<2x8x32xbf16>, vector<2x8x32xbf16>, vector<2x8x8xf32> -> vector<2x8x8xf32>
    "tpu.trace_stop"() : () -> ()
    %46 = vector.broadcast %2 : vector<1x8x8xf32> to vector<2x8x8xf32>
    %47 = arith.addf %45, %46 : vector<2x8x8xf32>
    %cst_24 = arith.constant dense<0xFF800000> : vector<2x8xf32>
    %48 = vector.multi_reduction <maximumf>, %47, %cst_24 [2] : vector<2x8x8xf32> to vector<2x8xf32>
    %49 = vector.shape_cast %48 : vector<2x8xf32> to vector<2x8x1xf32>
    %50 = vector.broadcast %49 : vector<2x8x1xf32> to vector<2x8x8xf32>
    %51 = arith.subf %47, %50 : vector<2x8x8xf32>
    %52 = math.exp %51 : vector<2x8x8xf32>
    %cst_25 = arith.constant dense<0.000000e+00> : vector<2x8xf32>
    %53 = vector.multi_reduction <add>, %52, %cst_25 [2] : vector<2x8x8xf32> to vector<2x8xf32>
    %54 = vector.shape_cast %53 : vector<2x8xf32> to vector<2x8x1xf32>
    %55 = tpu.reciprocal %54 {approx = true} : vector<2x8x1xf32> -> vector<2x8x1xf32>
    %56 = vector.broadcast %55 : vector<2x8x1xf32> to vector<2x8x8xf32>
    %57 = arith.mulf %52, %56 : vector<2x8x8xf32>
    %58 = arith.truncf %57 : vector<2x8x8xf32> to vector<2x8x8xbf16>
    "tpu.trace_start"() <{level = 10 : i32, message = "bqk,bkd->bqd"}> : () -> ()
    %cst_26 = arith.constant dense<0.000000e+00> : vector<2x8x32xf32>
    %59 = tpu.matmul %58, %44, %cst_26 {dimension_numbers = #tpu.dot_dimension_numbers<[2], [1], [1], [2], [0, 0, 0, 1, 1, 2], [0], [0]>} : vector<2x8x8xbf16>, vector<2x8x32xbf16>, vector<2x8x32xf32> -> vector<2x8x32xf32>
    "tpu.trace_stop"() : () -> ()
    %60 = tpu.concatenate %41, %59 in 2 : vector<2x8x32xf32>, vector<2x8x32xf32> -> vector<2x8x64xf32>
    %61 = vector.shape_cast %60 : vector<2x8x64xf32> to vector<16x64xf32>
    %62 = arith.truncf %61 : vector<16x64xf32> to vector<16x64xbf16>
    %c0_27 = arith.constant 0 : index
    %c0_28 = arith.constant 0 : index
    %c0_29 = arith.constant 0 : index
    %63 = vector.load %arg7[%c0_27, %c0_28, %c0_29] : memref<2x64x64xbf16, #tpu.memory_space<vmem>>, vector<1x64x64xbf16>
    %64 = vector.shape_cast %63 : vector<1x64x64xbf16> to vector<64x64xbf16>
    %cst_30 = arith.constant dense<0.000000e+00> : vector<16x64xf32>
    %65 = tpu.matmul %62, %64, %cst_30 {dimension_numbers = #tpu.dot_dimension_numbers<[1], [0], [0], [1], [0, 0, 1, 1], [], []>} : vector<16x64xbf16>, vector<64x64xbf16>, vector<16x64xf32> -> vector<16x64xf32>
    %c0_31 = arith.constant 0 : index
    %c0_32 = arith.constant 0 : index
    %c0_33 = arith.constant 0 : index
    %66 = vector.load %arg8[%c0_31, %c0_32, %c0_33] : memref<2x1x64xf32, #tpu.memory_space<vmem>>, vector<1x1x64xf32>
    %67 = vector.shape_cast %66 : vector<1x1x64xf32> to vector<1x64xf32>
    %68 = vector.broadcast %67 : vector<1x64xf32> to vector<16x64xf32>
    %69 = arith.addf %65, %68 : vector<16x64xf32>
    %70 = arith.addf %69, %0 : vector<16x64xf32>
    %c0_34 = arith.constant 0 : index
    %c0_35 = arith.constant 0 : index
    %c0_36 = arith.constant 0 : index
    %71 = vector.load %arg9[%c0_34, %c0_35, %c0_36] : memref<2x1x64xf32, #tpu.memory_space<vmem>>, vector<1x1x64xf32>
    %72 = vector.shape_cast %71 : vector<1x1x64xf32> to vector<1x64xf32>
    %c0_37 = arith.constant 0 : index
    %c0_38 = arith.constant 0 : index
    %c0_39 = arith.constant 0 : index
    %73 = vector.load %arg10[%c0_37, %c0_38, %c0_39] : memref<2x1x64xf32, #tpu.memory_space<vmem>>, vector<1x1x64xf32>
    %74 = vector.shape_cast %73 : vector<1x1x64xf32> to vector<1x64xf32>
    %cst_40 = arith.constant dense<0.000000e+00> : vector<16xf32>
    %75 = vector.multi_reduction <add>, %70, %cst_40 [1] : vector<16x64xf32> to vector<16xf32>
    %76 = vector.shape_cast %75 : vector<16xf32> to vector<16x1xf32>
    %cst_41 = arith.constant 6.400000e+01 : f32
    %77 = vector.broadcast %cst_41 : f32 to vector<16x1xf32>
    %78 = arith.divf %76, %77 : vector<16x1xf32>
    %79 = vector.broadcast %78 : vector<16x1xf32> to vector<16x64xf32>
    %80 = arith.subf %70, %79 : vector<16x64xf32>
    %81 = arith.mulf %80, %80 : vector<16x64xf32>
    %cst_42 = arith.constant dense<0.000000e+00> : vector<16xf32>
    %82 = vector.multi_reduction <add>, %81, %cst_42 [1] : vector<16x64xf32> to vector<16xf32>
    %83 = vector.shape_cast %82 : vector<16xf32> to vector<16x1xf32>
    %cst_43 = arith.constant 6.400000e+01 : f32
    %84 = vector.broadcast %cst_43 : f32 to vector<16x1xf32>
    %85 = arith.divf %83, %84 : vector<16x1xf32>
    %86 = vector.broadcast %78 : vector<16x1xf32> to vector<16x64xf32>
    %87 = arith.subf %70, %86 : vector<16x64xf32>
    %cst_44 = arith.constant 9.99999996E-13 : f32
    %88 = vector.broadcast %cst_44 : f32 to vector<16x1xf32>
    %89 = arith.addf %85, %88 : vector<16x1xf32>
    %90 = math.rsqrt %89 : vector<16x1xf32>
    %91 = vector.broadcast %90 : vector<16x1xf32> to vector<16x64xf32>
    %92 = arith.mulf %87, %91 : vector<16x64xf32>
    %93 = vector.broadcast %72 : vector<1x64xf32> to vector<16x64xf32>
    %94 = arith.mulf %92, %93 : vector<16x64xf32>
    %95 = vector.broadcast %74 : vector<1x64xf32> to vector<16x64xf32>
    %96 = arith.addf %94, %95 : vector<16x64xf32>
    %97 = arith.truncf %96 : vector<16x64xf32> to vector<16x64xbf16>
    %c0_45 = arith.constant 0 : index
    %c0_46 = arith.constant 0 : index
    %c0_47 = arith.constant 0 : index
    %98 = vector.load %arg11[%c0_45, %c0_46, %c0_47] : memref<2x64x256xbf16, #tpu.memory_space<vmem>>, vector<1x64x256xbf16>
    %99 = vector.shape_cast %98 : vector<1x64x256xbf16> to vector<64x256xbf16>
    %cst_48 = arith.constant dense<0.000000e+00> : vector<16x256xf32>
    %100 = tpu.matmul %97, %99, %cst_48 {dimension_numbers = #tpu.dot_dimension_numbers<[1], [0], [0], [1], [0, 0, 1, 1], [], []>} : vector<16x64xbf16>, vector<64x256xbf16>, vector<16x256xf32> -> vector<16x256xf32>
    %c0_49 = arith.constant 0 : index
    %c0_50 = arith.constant 0 : index
    %c0_51 = arith.constant 0 : index
    %101 = vector.load %arg12[%c0_49, %c0_50, %c0_51] : memref<2x1x256xf32, #tpu.memory_space<vmem>>, vector<1x1x256xf32>
    %102 = vector.shape_cast %101 : vector<1x1x256xf32> to vector<1x256xf32>
    %103 = vector.broadcast %102 : vector<1x256xf32> to vector<16x256xf32>
    %104 = arith.addf %100, %103 : vector<16x256xf32>
    %cst_52 = arith.constant 5.000000e-01 : f32
    %105 = vector.broadcast %cst_52 : f32 to vector<16x256xf32>
    %106 = arith.mulf %104, %105 : vector<16x256xf32>
    %cst_53 = arith.constant 2.000000e+00 : f32
    %107 = math.sqrt %cst_53 : f32
    %108 = vector.broadcast %107 : f32 to vector<16x256xf32>
    %109 = arith.divf %104, %108 : vector<16x256xf32>
    %110 = math.erf %109 : vector<16x256xf32>
    %cst_54 = arith.constant 1.000000e+00 : f32
    %111 = vector.broadcast %cst_54 : f32 to vector<16x256xf32>
    %112 = arith.addf %111, %110 : vector<16x256xf32>
    %113 = arith.mulf %106, %112 : vector<16x256xf32>
    %114 = arith.truncf %113 : vector<16x256xf32> to vector<16x256xbf16>
    %c0_55 = arith.constant 0 : index
    %c0_56 = arith.constant 0 : index
    %c0_57 = arith.constant 0 : index
    %115 = vector.load %arg13[%c0_55, %c0_56, %c0_57] : memref<2x256x64xbf16, #tpu.memory_space<vmem>>, vector<1x256x64xbf16>
    %116 = vector.shape_cast %115 : vector<1x256x64xbf16> to vector<256x64xbf16>
    %cst_58 = arith.constant dense<0.000000e+00> : vector<16x64xf32>
    %117 = tpu.matmul %114, %116, %cst_58 {dimension_numbers = #tpu.dot_dimension_numbers<[1], [0], [0], [1], [0, 0, 1, 1], [], []>} : vector<16x256xbf16>, vector<256x64xbf16>, vector<16x64xf32> -> vector<16x64xf32>
    %c0_59 = arith.constant 0 : index
    %c0_60 = arith.constant 0 : index
    %c0_61 = arith.constant 0 : index
    %118 = vector.load %arg14[%c0_59, %c0_60, %c0_61] : memref<2x1x64xf32, #tpu.memory_space<vmem>>, vector<1x1x64xf32>
    %119 = vector.shape_cast %118 : vector<1x1x64xf32> to vector<1x64xf32>
    %120 = vector.broadcast %119 : vector<1x64xf32> to vector<16x64xf32>
    %121 = arith.addf %117, %120 : vector<16x64xf32>
    %122 = arith.addf %121, %96 : vector<16x64xf32>
    %c0_62 = arith.constant 0 : index
    %c0_63 = arith.constant 0 : index
    %c0_64 = arith.constant 0 : index
    %123 = vector.load %arg15[%c0_62, %c0_63, %c0_64] : memref<2x1x64xf32, #tpu.memory_space<vmem>>, vector<1x1x64xf32>
    %124 = vector.shape_cast %123 : vector<1x1x64xf32> to vector<1x64xf32>
    %c0_65 = arith.constant 0 : index
    %c0_66 = arith.constant 0 : index
    %c0_67 = arith.constant 0 : index
    %125 = vector.load %arg16[%c0_65, %c0_66, %c0_67] : memref<2x1x64xf32, #tpu.memory_space<vmem>>, vector<1x1x64xf32>
    %126 = vector.shape_cast %125 : vector<1x1x64xf32> to vector<1x64xf32>
    %cst_68 = arith.constant dense<0.000000e+00> : vector<16xf32>
    %127 = vector.multi_reduction <add>, %122, %cst_68 [1] : vector<16x64xf32> to vector<16xf32>
    %128 = vector.shape_cast %127 : vector<16xf32> to vector<16x1xf32>
    %cst_69 = arith.constant 6.400000e+01 : f32
    %129 = vector.broadcast %cst_69 : f32 to vector<16x1xf32>
    %130 = arith.divf %128, %129 : vector<16x1xf32>
    %131 = vector.broadcast %130 : vector<16x1xf32> to vector<16x64xf32>
    %132 = arith.subf %122, %131 : vector<16x64xf32>
    %133 = arith.mulf %132, %132 : vector<16x64xf32>
    %cst_70 = arith.constant dense<0.000000e+00> : vector<16xf32>
    %134 = vector.multi_reduction <add>, %133, %cst_70 [1] : vector<16x64xf32> to vector<16xf32>
    %135 = vector.shape_cast %134 : vector<16xf32> to vector<16x1xf32>
    %cst_71 = arith.constant 6.400000e+01 : f32
    %136 = vector.broadcast %cst_71 : f32 to vector<16x1xf32>
    %137 = arith.divf %135, %136 : vector<16x1xf32>
    %138 = vector.broadcast %130 : vector<16x1xf32> to vector<16x64xf32>
    %139 = arith.subf %122, %138 : vector<16x64xf32>
    %cst_72 = arith.constant 9.99999996E-13 : f32
    %140 = vector.broadcast %cst_72 : f32 to vector<16x1xf32>
    %141 = arith.addf %137, %140 : vector<16x1xf32>
    %142 = math.rsqrt %141 : vector<16x1xf32>
    %143 = vector.broadcast %142 : vector<16x1xf32> to vector<16x64xf32>
    %144 = arith.mulf %139, %143 : vector<16x64xf32>
    %145 = vector.broadcast %124 : vector<1x64xf32> to vector<16x64xf32>
    %146 = arith.mulf %144, %145 : vector<16x64xf32>
    %147 = vector.broadcast %126 : vector<1x64xf32> to vector<16x64xf32>
    %148 = arith.addf %146, %147 : vector<16x64xf32>
    %c0_73 = arith.constant 0 : index
    %c0_74 = arith.constant 0 : index
    %c0_75 = arith.constant 0 : index
    %149 = vector.load %arg17[%c0_73, %c0_74, %c0_75] : memref<2x16x64xf32, #tpu.memory_space<vmem>>, vector<1x16x64xf32>
    %150 = vector.shape_cast %149 : vector<1x16x64xf32> to vector<16x64xf32>
    %151 = vector.shape_cast %148 : vector<16x64xf32> to vector<1x16x64xf32>
    tpu.vector_store %arg17[%c0_73, %c0_74, %c0_75], %151 {strides = array<i32>} : memref<2x16x64xf32, #tpu.memory_space<vmem>>, vector<1x16x64xf32>,
    %152 = arith.addf %1, %148 : vector<16x64xf32>
    %153 = arith.truncf %152 : vector<16x64xf32> to vector<16x64xbf16>
    %154 = arith.truncf %148 : vector<16x64xf32> to vector<16x64xbf16>
    %c1 = arith.constant 1 : index
    %c0_76 = arith.constant 0 : index
    %c0_77 = arith.constant 0 : index
    %155 = vector.load %arg3[%c1, %c0_76, %c0_77] : memref<2x64x128xbf16, #tpu.memory_space<vmem>>, vector<1x64x128xbf16>
    %156 = vector.shape_cast %155 : vector<1x64x128xbf16> to vector<64x128xbf16>
    %cst_78 = arith.constant dense<0.000000e+00> : vector<16x128xf32>
    %157 = tpu.matmul %153, %156, %cst_78 {dimension_numbers = #tpu.dot_dimension_numbers<[1], [0], [0], [1], [0, 0, 1, 1], [], []>} : vector<16x64xbf16>, vector<64x128xbf16>, vector<16x128xf32> -> vector<16x128xf32>
    %c1_79 = arith.constant 1 : index
    %c0_80 = arith.constant 0 : index
    %c0_81 = arith.constant 0 : index
    %158 = vector.load %arg4[%c1_79, %c0_80, %c0_81] : memref<2x1x128xf32, #tpu.memory_space<vmem>>, vector<1x1x128xf32>
    %159 = vector.shape_cast %158 : vector<1x1x128xf32> to vector<1x128xf32>
    %160 = vector.broadcast %159 : vector<1x128xf32> to vector<16x128xf32>
    %161 = arith.addf %157, %160 : vector<16x128xf32>
    %c1_82 = arith.constant 1 : index
    %c0_83 = arith.constant 0 : index
    %c0_84 = arith.constant 0 : index
    %162 = vector.load %arg5[%c1_82, %c0_83, %c0_84] : memref<2x64x64xbf16, #tpu.memory_space<vmem>>, vector<1x64x64xbf16>
    %163 = vector.shape_cast %162 : vector<1x64x64xbf16> to vector<64x64xbf16>
    %cst_85 = arith.constant dense<0.000000e+00> : vector<16x64xf32>
    %164 = tpu.matmul %154, %163, %cst_85 {dimension_numbers = #tpu.dot_dimension_numbers<[1], [0], [0], [1], [0, 0, 1, 1], [], []>} : vector<16x64xbf16>, vector<64x64xbf16>, vector<16x64xf32> -> vector<16x64xf32>
    %c1_86 = arith.constant 1 : index
    %c0_87 = arith.constant 0 : index
    %c0_88 = arith.constant 0 : index
    %165 = vector.load %arg6[%c1_86, %c0_87, %c0_88] : memref<2x1x64xf32, #tpu.memory_space<vmem>>, vector<1x1x64xf32>
    %166 = vector.shape_cast %165 : vector<1x1x64xf32> to vector<1x64xf32>
    %167 = vector.broadcast %166 : vector<1x64xf32> to vector<16x64xf32>
    %168 = arith.addf %164, %167 : vector<16x64xf32>
    %169 = arith.truncf %161 : vector<16x128xf32> to vector<16x128xbf16>
    %170 = vector.shape_cast %169 : vector<16x128xbf16> to vector<2x8x128xbf16>
    %171 = arith.truncf %168 : vector<16x64xf32> to vector<16x64xbf16>
    %172 = vector.shape_cast %171 : vector<16x64xbf16> to vector<2x8x64xbf16>
    %173 = vector.extract_strided_slice %170 {offsets = [0, 0, 0], sizes = [2, 8, 32], strides = [1, 1, 1]} : vector<2x8x128xbf16> to vector<2x8x32xbf16>
    %174 = vector.extract_strided_slice %170 {offsets = [0, 0, 64], sizes = [2, 8, 32], strides = [1, 1, 1]} : vector<2x8x128xbf16> to vector<2x8x32xbf16>
    %175 = vector.extract_strided_slice %172 {offsets = [0, 0, 0], sizes = [2, 8, 32], strides = [1, 1, 1]} : vector<2x8x64xbf16> to vector<2x8x32xbf16>
    "tpu.trace_start"() <{level = 10 : i32, message = "bqd,bkd->bqk"}> : () -> ()
    %cst_89 = arith.constant dense<0.000000e+00> : vector<2x8x8xf32>
    %176 = tpu.matmul %173, %174, %cst_89 {dimension_numbers = #tpu.dot_dimension_numbers<[2], [2], [1], [1], [0, 0, 0, 1, 1, 1], [0], [0]>} : vector<2x8x32xbf16>, vector<2x8x32xbf16>, vector<2x8x8xf32> -> vector<2x8x8xf32>
    "tpu.trace_stop"() : () -> ()
    %177 = vector.broadcast %2 : vector<1x8x8xf32> to vector<2x8x8xf32>
    %178 = arith.addf %176, %177 : vector<2x8x8xf32>
    %cst_90 = arith.constant dense<0xFF800000> : vector<2x8xf32>
    %179 = vector.multi_reduction <maximumf>, %178, %cst_90 [2] : vector<2x8x8xf32> to vector<2x8xf32>
    %180 = vector.shape_cast %179 : vector<2x8xf32> to vector<2x8x1xf32>
    %181 = vector.broadcast %180 : vector<2x8x1xf32> to vector<2x8x8xf32>
    %182 = arith.subf %178, %181 : vector<2x8x8xf32>
    %183 = math.exp %182 : vector<2x8x8xf32>
    %cst_91 = arith.constant dense<0.000000e+00> : vector<2x8xf32>
    %184 = vector.multi_reduction <add>, %183, %cst_91 [2] : vector<2x8x8xf32> to vector<2x8xf32>
    %185 = vector.shape_cast %184 : vector<2x8xf32> to vector<2x8x1xf32>
    %186 = tpu.reciprocal %185 {approx = true} : vector<2x8x1xf32> -> vector<2x8x1xf32>
    %187 = vector.broadcast %186 : vector<2x8x1xf32> to vector<2x8x8xf32>
    %188 = arith.mulf %183, %187 : vector<2x8x8xf32>
    %189 = arith.truncf %188 : vector<2x8x8xf32> to vector<2x8x8xbf16>
    "tpu.trace_start"() <{level = 10 : i32, message = "bqk,bkd->bqd"}> : () -> ()
    %cst_92 = arith.constant dense<0.000000e+00> : vector<2x8x32xf32>
    %190 = tpu.matmul %189, %175, %cst_92 {dimension_numbers = #tpu.dot_dimension_numbers<[2], [1], [1], [2], [0, 0, 0, 1, 1, 2], [0], [0]>} : vector<2x8x8xbf16>, vector<2x8x32xbf16>, vector<2x8x32xf32> -> vector<2x8x32xf32>
    "tpu.trace_stop"() : () -> ()
    %191 = vector.extract_strided_slice %170 {offsets = [0, 0, 32], sizes = [2, 8, 32], strides = [1, 1, 1]} : vector<2x8x128xbf16> to vector<2x8x32xbf16>
    %192 = vector.extract_strided_slice %170 {offsets = [0, 0, 96], sizes = [2, 8, 32], strides = [1, 1, 1]} : vector<2x8x128xbf16> to vector<2x8x32xbf16>
    %193 = vector.extract_strided_slice %172 {offsets = [0, 0, 32], sizes = [2, 8, 32], strides = [1, 1, 1]} : vector<2x8x64xbf16> to vector<2x8x32xbf16>
    "tpu.trace_start"() <{level = 10 : i32, message = "bqd,bkd->bqk"}> : () -> ()
    %cst_93 = arith.constant dense<0.000000e+00> : vector<2x8x8xf32>
    %194 = tpu.matmul %191, %192, %cst_93 {dimension_numbers = #tpu.dot_dimension_numbers<[2], [2], [1], [1], [0, 0, 0, 1, 1, 1], [0], [0]>} : vector<2x8x32xbf16>, vector<2x8x32xbf16>, vector<2x8x8xf32> -> vector<2x8x8xf32>
    "tpu.trace_stop"() : () -> ()
    %195 = vector.broadcast %2 : vector<1x8x8xf32> to vector<2x8x8xf32>
    %196 = arith.addf %194, %195 : vector<2x8x8xf32>
    %cst_94 = arith.constant dense<0xFF800000> : vector<2x8xf32>
    %197 = vector.multi_reduction <maximumf>, %196, %cst_94 [2] : vector<2x8x8xf32> to vector<2x8xf32>
    %198 = vector.shape_cast %197 : vector<2x8xf32> to vector<2x8x1xf32>
    %199 = vector.broadcast %198 : vector<2x8x1xf32> to vector<2x8x8xf32>
    %200 = arith.subf %196, %199 : vector<2x8x8xf32>
    %201 = math.exp %200 : vector<2x8x8xf32>
    %cst_95 = arith.constant dense<0.000000e+00> : vector<2x8xf32>
    %202 = vector.multi_reduction <add>, %201, %cst_95 [2] : vector<2x8x8xf32> to vector<2x8xf32>
    %203 = vector.shape_cast %202 : vector<2x8xf32> to vector<2x8x1xf32>
    %204 = tpu.reciprocal %203 {approx = true} : vector<2x8x1xf32> -> vector<2x8x1xf32>
    %205 = vector.broadcast %204 : vector<2x8x1xf32> to vector<2x8x8xf32>
    %206 = arith.mulf %201, %205 : vector<2x8x8xf32>
    %207 = arith.truncf %206 : vector<2x8x8xf32> to vector<2x8x8xbf16>
    "tpu.trace_start"() <{level = 10 : i32, message = "bqk,bkd->bqd"}> : () -> ()
    %cst_96 = arith.constant dense<0.000000e+00> : vector<2x8x32xf32>
    %208 = tpu.matmul %207, %193, %cst_96 {dimension_numbers = #tpu.dot_dimension_numbers<[2], [1], [1], [2], [0, 0, 0, 1, 1, 2], [0], [0]>} : vector<2x8x8xbf16>, vector<2x8x32xbf16>, vector<2x8x32xf32> -> vector<2x8x32xf32>
    "tpu.trace_stop"() : () -> ()
    %209 = tpu.concatenate %190, %208 in 2 : vector<2x8x32xf32>, vector<2x8x32xf32> -> vector<2x8x64xf32>
    %210 = vector.shape_cast %209 : vector<2x8x64xf32> to vector<16x64xf32>
    %211 = arith.truncf %210 : vector<16x64xf32> to vector<16x64xbf16>
    %c1_97 = arith.constant 1 : index
    %c0_98 = arith.constant 0 : index
    %c0_99 = arith.constant 0 : index
    %212 = vector.load %arg7[%c1_97, %c0_98, %c0_99] : memref<2x64x64xbf16, #tpu.memory_space<vmem>>, vector<1x64x64xbf16>
    %213 = vector.shape_cast %212 : vector<1x64x64xbf16> to vector<64x64xbf16>
    %cst_100 = arith.constant dense<0.000000e+00> : vector<16x64xf32>
    %214 = tpu.matmul %211, %213, %cst_100 {dimension_numbers = #tpu.dot_dimension_numbers<[1], [0], [0], [1], [0, 0, 1, 1], [], []>} : vector<16x64xbf16>, vector<64x64xbf16>, vector<16x64xf32> -> vector<16x64xf32>
    %c1_101 = arith.constant 1 : index
    %c0_102 = arith.constant 0 : index
    %c0_103 = arith.constant 0 : index
    %215 = vector.load %arg8[%c1_101, %c0_102, %c0_103] : memref<2x1x64xf32, #tpu.memory_space<vmem>>, vector<1x1x64xf32>
    %216 = vector.shape_cast %215 : vector<1x1x64xf32> to vector<1x64xf32>
    %217 = vector.broadcast %216 : vector<1x64xf32> to vector<16x64xf32>
    %218 = arith.addf %214, %217 : vector<16x64xf32>
    %219 = arith.addf %218, %148 : vector<16x64xf32>
    %c1_104 = arith.constant 1 : index
    %c0_105 = arith.constant 0 : index
    %c0_106 = arith.constant 0 : index
    %220 = vector.load %arg9[%c1_104, %c0_105, %c0_106] : memref<2x1x64xf32, #tpu.memory_space<vmem>>, vector<1x1x64xf32>
    %221 = vector.shape_cast %220 : vector<1x1x64xf32> to vector<1x64xf32>
    %c1_107 = arith.constant 1 : index
    %c0_108 = arith.constant 0 : index
    %c0_109 = arith.constant 0 : index
    %222 = vector.load %arg10[%c1_107, %c0_108, %c0_109] : memref<2x1x64xf32, #tpu.memory_space<vmem>>, vector<1x1x64xf32>
    %223 = vector.shape_cast %222 : vector<1x1x64xf32> to vector<1x64xf32>
    %cst_110 = arith.constant dense<0.000000e+00> : vector<16xf32>
    %224 = vector.multi_reduction <add>, %219, %cst_110 [1] : vector<16x64xf32> to vector<16xf32>
    %225 = vector.shape_cast %224 : vector<16xf32> to vector<16x1xf32>
    %cst_111 = arith.constant 6.400000e+01 : f32
    %226 = vector.broadcast %cst_111 : f32 to vector<16x1xf32>
    %227 = arith.divf %225, %226 : vector<16x1xf32>
    %228 = vector.broadcast %227 : vector<16x1xf32> to vector<16x64xf32>
    %229 = arith.subf %219, %228 : vector<16x64xf32>
    %230 = arith.mulf %229, %229 : vector<16x64xf32>
    %cst_112 = arith.constant dense<0.000000e+00> : vector<16xf32>
    %231 = vector.multi_reduction <add>, %230, %cst_112 [1] : vector<16x64xf32> to vector<16xf32>
    %232 = vector.shape_cast %231 : vector<16xf32> to vector<16x1xf32>
    %cst_113 = arith.constant 6.400000e+01 : f32
    %233 = vector.broadcast %cst_113 : f32 to vector<16x1xf32>
    %234 = arith.divf %232, %233 : vector<16x1xf32>
    %235 = vector.broadcast %227 : vector<16x1xf32> to vector<16x64xf32>
    %236 = arith.subf %219, %235 : vector<16x64xf32>
    %cst_114 = arith.constant 9.99999996E-13 : f32
    %237 = vector.broadcast %cst_114 : f32 to vector<16x1xf32>
    %238 = arith.addf %234, %237 : vector<16x1xf32>
    %239 = math.rsqrt %238 : vector<16x1xf32>
    %240 = vector.broadcast %239 : vector<16x1xf32> to vector<16x64xf32>
    %241 = arith.mulf %236, %240 : vector<16x64xf32>
    %242 = vector.broadcast %221 : vector<1x64xf32> to vector<16x64xf32>
    %243 = arith.mulf %241, %242 : vector<16x64xf32>
    %244 = vector.broadcast %223 : vector<1x64xf32> to vector<16x64xf32>
    %245 = arith.addf %243, %244 : vector<16x64xf32>
    %246 = arith.truncf %245 : vector<16x64xf32> to vector<16x64xbf16>
    %c1_115 = arith.constant 1 : index
    %c0_116 = arith.constant 0 : index
    %c0_117 = arith.constant 0 : index
    %247 = vector.load %arg11[%c1_115, %c0_116, %c0_117] : memref<2x64x256xbf16, #tpu.memory_space<vmem>>, vector<1x64x256xbf16>
    %248 = vector.shape_cast %247 : vector<1x64x256xbf16> to vector<64x256xbf16>
    %cst_118 = arith.constant dense<0.000000e+00> : vector<16x256xf32>
    %249 = tpu.matmul %246, %248, %cst_118 {dimension_numbers = #tpu.dot_dimension_numbers<[1], [0], [0], [1], [0, 0, 1, 1], [], []>} : vector<16x64xbf16>, vector<64x256xbf16>, vector<16x256xf32> -> vector<16x256xf32>
    %c1_119 = arith.constant 1 : index
    %c0_120 = arith.constant 0 : index
    %c0_121 = arith.constant 0 : index
    %250 = vector.load %arg12[%c1_119, %c0_120, %c0_121] : memref<2x1x256xf32, #tpu.memory_space<vmem>>, vector<1x1x256xf32>
    %251 = vector.shape_cast %250 : vector<1x1x256xf32> to vector<1x256xf32>
    %252 = vector.broadcast %251 : vector<1x256xf32> to vector<16x256xf32>
    %253 = arith.addf %249, %252 : vector<16x256xf32>
    %cst_122 = arith.constant 5.000000e-01 : f32
    %254 = vector.broadcast %cst_122 : f32 to vector<16x256xf32>
    %255 = arith.mulf %253, %254 : vector<16x256xf32>
    %cst_123 = arith.constant 2.000000e+00 : f32
    %256 = math.sqrt %cst_123 : f32
    %257 = vector.broadcast %256 : f32 to vector<16x256xf32>
    %258 = arith.divf %253, %257 : vector<16x256xf32>
    %259 = math.erf %258 : vector<16x256xf32>
    %cst_124 = arith.constant 1.000000e+00 : f32
    %260 = vector.broadcast %cst_124 : f32 to vector<16x256xf32>
    %261 = arith.addf %260, %259 : vector<16x256xf32>
    %262 = arith.mulf %255, %261 : vector<16x256xf32>
    %263 = arith.truncf %262 : vector<16x256xf32> to vector<16x256xbf16>
    %c1_125 = arith.constant 1 : index
    %c0_126 = arith.constant 0 : index
    %c0_127 = arith.constant 0 : index
    %264 = vector.load %arg13[%c1_125, %c0_126, %c0_127] : memref<2x256x64xbf16, #tpu.memory_space<vmem>>, vector<1x256x64xbf16>
    %265 = vector.shape_cast %264 : vector<1x256x64xbf16> to vector<256x64xbf16>
    %cst_128 = arith.constant dense<0.000000e+00> : vector<16x64xf32>
    %266 = tpu.matmul %263, %265, %cst_128 {dimension_numbers = #tpu.dot_dimension_numbers<[1], [0], [0], [1], [0, 0, 1, 1], [], []>} : vector<16x256xbf16>, vector<256x64xbf16>, vector<16x64xf32> -> vector<16x64xf32>
    %c1_129 = arith.constant 1 : index
    %c0_130 = arith.constant 0 : index
    %c0_131 = arith.constant 0 : index
    %267 = vector.load %arg14[%c1_129, %c0_130, %c0_131] : memref<2x1x64xf32, #tpu.memory_space<vmem>>, vector<1x1x64xf32>
    %268 = vector.shape_cast %267 : vector<1x1x64xf32> to vector<1x64xf32>
    %269 = vector.broadcast %268 : vector<1x64xf32> to vector<16x64xf32>
    %270 = arith.addf %266, %269 : vector<16x64xf32>
    %271 = arith.addf %270, %245 : vector<16x64xf32>
    %c1_132 = arith.constant 1 : index
    %c0_133 = arith.constant 0 : index
    %c0_134 = arith.constant 0 : index
    %272 = vector.load %arg15[%c1_132, %c0_133, %c0_134] : memref<2x1x64xf32, #tpu.memory_space<vmem>>, vector<1x1x64xf32>
    %273 = vector.shape_cast %272 : vector<1x1x64xf32> to vector<1x64xf32>
    %c1_135 = arith.constant 1 : index
    %c0_136 = arith.constant 0 : index
    %c0_137 = arith.constant 0 : index
    %274 = vector.load %arg16[%c1_135, %c0_136, %c0_137] : memref<2x1x64xf32, #tpu.memory_space<vmem>>, vector<1x1x64xf32>
    %275 = vector.shape_cast %274 : vector<1x1x64xf32> to vector<1x64xf32>
    %cst_138 = arith.constant dense<0.000000e+00> : vector<16xf32>
    %276 = vector.multi_reduction <add>, %271, %cst_138 [1] : vector<16x64xf32> to vector<16xf32>
    %277 = vector.shape_cast %276 : vector<16xf32> to vector<16x1xf32>
    %cst_139 = arith.constant 6.400000e+01 : f32
    %278 = vector.broadcast %cst_139 : f32 to vector<16x1xf32>
    %279 = arith.divf %277, %278 : vector<16x1xf32>
    %280 = vector.broadcast %279 : vector<16x1xf32> to vector<16x64xf32>
    %281 = arith.subf %271, %280 : vector<16x64xf32>
    %282 = arith.mulf %281, %281 : vector<16x64xf32>
    %cst_140 = arith.constant dense<0.000000e+00> : vector<16xf32>
    %283 = vector.multi_reduction <add>, %282, %cst_140 [1] : vector<16x64xf32> to vector<16xf32>
    %284 = vector.shape_cast %283 : vector<16xf32> to vector<16x1xf32>
    %cst_141 = arith.constant 6.400000e+01 : f32
    %285 = vector.broadcast %cst_141 : f32 to vector<16x1xf32>
    %286 = arith.divf %284, %285 : vector<16x1xf32>
    %287 = vector.broadcast %279 : vector<16x1xf32> to vector<16x64xf32>
    %288 = arith.subf %271, %287 : vector<16x64xf32>
    %cst_142 = arith.constant 9.99999996E-13 : f32
    %289 = vector.broadcast %cst_142 : f32 to vector<16x1xf32>
    %290 = arith.addf %286, %289 : vector<16x1xf32>
    %291 = math.rsqrt %290 : vector<16x1xf32>
    %292 = vector.broadcast %291 : vector<16x1xf32> to vector<16x64xf32>
    %293 = arith.mulf %288, %292 : vector<16x64xf32>
    %294 = vector.broadcast %273 : vector<1x64xf32> to vector<16x64xf32>
    %295 = arith.mulf %293, %294 : vector<16x64xf32>
    %296 = vector.broadcast %275 : vector<1x64xf32> to vector<16x64xf32>
    %297 = arith.addf %295, %296 : vector<16x64xf32>
    %c1_143 = arith.constant 1 : index
    %c0_144 = arith.constant 0 : index
    %c0_145 = arith.constant 0 : index
    %298 = vector.load %arg17[%c1_143, %c0_144, %c0_145] : memref<2x16x64xf32, #tpu.memory_space<vmem>>, vector<1x16x64xf32>
    %299 = vector.shape_cast %298 : vector<1x16x64xf32> to vector<16x64xf32>
    %300 = vector.shape_cast %297 : vector<16x64xf32> to vector<1x16x64xf32>
    tpu.vector_store %arg17[%c1_143, %c0_144, %c0_145], %300 {strides = array<i32>} : memref<2x16x64xf32, #tpu.memory_space<vmem>>, vector<1x16x64xf32>,
    return
  }
}

</mosaic_0001>

<llo_original>
// kernel: tpu_custom_call.1
$region0: #{tpu_custom_call.1}
  #allocation0 [shape = 'u32[]', space=smem, size = 0x4, offset = 0x4, fixed_abs, tag = 'smem constant byte address 0x4 - core index']
  #allocation1 [shape = 'u32[72,128]{1,0:T(1,128)}', space=vmem, size = 0x9000, scoped, tag = 'internal scratch']
  %s0 = inlined_call_operand.vmem [shape: f32[16,64], index: 0, kind: input, shape index: {}]
  %s1 = inlined_call_operand.vmem [shape: f32[16,64], index: 1, kind: input, shape index: {}]
  %s2 = inlined_call_operand.vmem [shape: f32[1,8,8], index: 2, kind: input, shape index: {}]
  %s3 = inlined_call_operand.vmem [shape: bf16[2,64,128], index: 3, kind: input, shape index: {}]
  %s4 = inlined_call_operand.vmem [shape: f32[2,1,128], index: 4, kind: input, shape index: {}]
  %s5 = inlined_call_operand.vmem [shape: bf16[2,64,64], index: 5, kind: input, shape index: {}]
  %s6 = inlined_call_operand.vmem [shape: f32[2,1,64], index: 6, kind: input, shape index: {}]
  %s7 = inlined_call_operand.vmem [shape: bf16[2,64,64], index: 7, kind: input, shape index: {}]
  %s8 = inlined_call_operand.vmem [shape: f32[2,1,64], index: 8, kind: input, shape index: {}]
  %s9 = inlined_call_operand.vmem [shape: f32[2,1,64], index: 9, kind: input, shape index: {}]
  %s10 = inlined_call_operand.vmem [shape: f32[2,1,64], index: 10, kind: input, shape index: {}]
  %s11 = inlined_call_operand.vmem [shape: bf16[2,64,256], index: 11, kind: input, shape index: {}]
  %s12 = inlined_call_operand.vmem [shape: f32[2,1,256], index: 12, kind: input, shape index: {}]
  %s13 = inlined_call_operand.vmem [shape: bf16[2,256,64], index: 13, kind: input, shape index: {}]
  %s14 = inlined_call_operand.vmem [shape: f32[2,1,64], index: 14, kind: input, shape index: {}]
  %s15 = inlined_call_operand.vmem [shape: f32[2,1,64], index: 15, kind: input, shape index: {}]
  %s16 = inlined_call_operand.vmem [shape: f32[2,1,64], index: 16, kind: input, shape index: {}]
  %s17 = inlined_call_operand.hbm [shape: f32[2,16,64], index: 17, kind: output, shape index: {}]
  %s18 = sld [smem:[#allocation0]]
  $region78: #{tpu_custom_call.1} parent=0
    _
  %s20 = ssub.s32 1, %s18
  %s21 = scalar_select 0, %s20, %s18
  $region1: #{tpu_custom_call.1} parent=0
    #allocation2 [shape = 'u8[16384]{0}', space=vmem, size = 0x4000, scoped, tag = 'output window, operand 0, single buffered']
    #allocation3 [shape = 's32[1]{0}', space=sflag, size = 0x4, scoped, tag = 'scoped memory for tpu_custom_call.1']
    %22 = vsyncpa [#allocation3], 0
    // Predicated region
    $region2: #{tpu_custom_call.1} parent=1 // pred_check
      _
    $region3: #{tpu_custom_call.1} parent=1 // pred_check_branch
      %24 = sbr.rel (0) target = $region5
    $region4: #{tpu_custom_call.1} parent=1 // pred_region
      _
    $region5: #{tpu_custom_call.1} parent=1 // pred_fallthru
      _
    // Predicated region
    $region6: #{tpu_custom_call.1} parent=1 // pred_check
      _
    $region7: #{tpu_custom_call.1} parent=1 // pred_check_branch
      %26 = sbr.rel (0) target = $region9
    $region8: #{tpu_custom_call.1} parent=1 // pred_region
      _
    $region9: #{tpu_custom_call.1} parent=1 // pred_fallthru
      _
    // Predicated region
    $region10: #{tpu_custom_call.1} parent=1 // pred_check
      _
    $region11: #{tpu_custom_call.1} parent=1 // pred_check_branch
      %28 = sbr.rel (0) target = $region13
    $region12: #{tpu_custom_call.1} parent=1 // pred_region
      _
    $region13: #{tpu_custom_call.1} parent=1 // pred_fallthru
      _
    // Predicated region
    $region14: #{tpu_custom_call.1} parent=1 // pred_check
      _
    $region15: #{tpu_custom_call.1} parent=1 // pred_check_branch
      %30 = sbr.rel (0) target = $region17
    $region16: #{tpu_custom_call.1} parent=1 // pred_region
      _
    $region17: #{tpu_custom_call.1} parent=1 // pred_fallthru
      _
    // Predicated region
    $region18: #{tpu_custom_call.1} parent=1 // pred_check
      _
    $region19: #{tpu_custom_call.1} parent=1 // pred_check_branch
      %32 = sbr.rel (0) target = $region21
    $region20: #{tpu_custom_call.1} parent=1 // pred_region
      _
    $region21: #{tpu_custom_call.1} parent=1 // pred_fallthru
      _
    // Predicated region
    $region22: #{tpu_custom_call.1} parent=1 // pred_check
      _
    $region23: #{tpu_custom_call.1} parent=1 // pred_check_branch
      %34 = sbr.rel (0) target = $region25
    $region24: #{tpu_custom_call.1} parent=1 // pred_region
      _
    $region25: #{tpu_custom_call.1} parent=1 // pred_fallthru
      _
    // Predicated region
    $region26: #{tpu_custom_call.1} parent=1 // pred_check
      _
    $region27: #{tpu_custom_call.1} parent=1 // pred_check_branch
      %36 = sbr.rel (0) target = $region29
    $region28: #{tpu_custom_call.1} parent=1 // pred_region
      _
    $region29: #{tpu_custom_call.1} parent=1 // pred_fallthru
      _
    // Predicated region
    $region30: #{tpu_custom_call.1} parent=1 // pred_check
      _
    $region31: #{tpu_custom_call.1} parent=1 // pred_check_branch
      %38 = sbr.rel (0) target = $region33
    $region32: #{tpu_custom_call.1} parent=1 // pred_region
      _
    $region33: #{tpu_custom_call.1} parent=1 // pred_fallthru
      _
    // Predicated region
    $region34: #{tpu_custom_call.1} parent=1 // pred_check
      _
    $region35: #{tpu_custom_call.1} parent=1 // pred_check_branch
      %40 = sbr.rel (0) target = $region37
    $region36: #{tpu_custom_call.1} parent=1 // pred_region
      _
    $region37: #{tpu_custom_call.1} parent=1 // pred_fallthru
      _
    // Predicated region
    $region38: #{tpu_custom_call.1} parent=1 // pred_check
      _
    $region39: #{tpu_custom_call.1} parent=1 // pred_check_branch
      %42 = sbr.rel (0) target = $region41
    $region40: #{tpu_custom_call.1} parent=1 // pred_region
      _
    $region41: #{tpu_custom_call.1} parent=1 // pred_fallthru
      _
    // Predicated region
    $region42: #{tpu_custom_call.1} parent=1 // pred_check
      _
    $region43: #{tpu_custom_call.1} parent=1 // pred_check_branch
      %44 = sbr.rel (0) target = $region45
    $region44: #{tpu_custom_call.1} parent=1 // pred_region
      _
    $region45: #{tpu_custom_call.1} parent=1 // pred_fallthru
      _
    // Predicated region
    $region46: #{tpu_custom_call.1} parent=1 // pred_check
      _
    $region47: #{tpu_custom_call.1} parent=1 // pred_check_branch
      %46 = sbr.rel (0) target = $region49
    $region48: #{tpu_custom_call.1} parent=1 // pred_region
      _
    $region49: #{tpu_custom_call.1} parent=1 // pred_fallthru
      _
    // Predicated region
    $region50: #{tpu_custom_call.1} parent=1 // pred_check
      _
    $region51: #{tpu_custom_call.1} parent=1 // pred_check_branch
      %48 = sbr.rel (0) target = $region53
    $region52: #{tpu_custom_call.1} parent=1 // pred_region
      _
    $region53: #{tpu_custom_call.1} parent=1 // pred_fallthru
      _
    // Predicated region
    $region54: #{tpu_custom_call.1} parent=1 // pred_check
      _
    $region55: #{tpu_custom_call.1} parent=1 // pred_check_branch
      %50 = sbr.rel (0) target = $region57
    $region56: #{tpu_custom_call.1} parent=1 // pred_region
      _
    $region57: #{tpu_custom_call.1} parent=1 // pred_fallthru
      _
    // Predicated region
    $region58: #{tpu_custom_call.1} parent=1 // pred_check
      _
    $region59: #{tpu_custom_call.1} parent=1 // pred_check_branch
      %52 = sbr.rel (0) target = $region61
    $region60: #{tpu_custom_call.1} parent=1 // pred_region
      _
    $region61: #{tpu_custom_call.1} parent=1 // pred_fallthru
      _
    // Predicated region
    $region62: #{tpu_custom_call.1} parent=1 // pred_check
      _
    $region63: #{tpu_custom_call.1} parent=1 // pred_check_branch
      %54 = sbr.rel (0) target = $region65
    $region64: #{tpu_custom_call.1} parent=1 // pred_region
      _
    $region65: #{tpu_custom_call.1} parent=1 // pred_fallthru
      _
    // Predicated region
    $region66: #{tpu_custom_call.1} parent=1 // pred_check
      _
    $region67: #{tpu_custom_call.1} parent=1 // pred_check_branch
      %56 = sbr.rel (0) target = $region69
    $region68: #{tpu_custom_call.1} parent=1 // pred_region
      _
    $region69: #{tpu_custom_call.1} parent=1 // pred_fallthru
      _
    %v58 = vld [vmem:[%s0] sm:$0xff]
    %v59 = vld [vmem:[%s0 + $0x8] sm:$0xff]
    %v60 = vld [vmem:[%s1] sm:$0xff]
    %v61 = vld [vmem:[%s1 + $0x8] sm:$0xff]
    %v62 = vld [vmem:[%s2] sm:$0xff]
    %v63 = vadd.f32 %v60, %v58
    %v64 = vadd.f32 %v61, %v59
    %v65 = vpack.c.bf16 %v64, %v63
    %v66 = vpack.c.bf16 %v59, %v58
    %v67 = vld [vmem:[%s3] sm:$0xf]
    %v68 = vld [vmem:[%s3 + $0x4] sm:$0xf]
    %v69 = vld [vmem:[%s3 + $0x8] sm:$0xf]
    %v70 = vld [vmem:[%s3 + $0xc] sm:$0xf]
    %v71 = vld [vmem:[%s3 + $0x10] sm:$0xf]
    %v72 = vld [vmem:[%s3 + $0x14] sm:$0xf]
    %v73 = vld [vmem:[%s3 + $0x18] sm:$0xf]
    %v74 = vld [vmem:[%s3 + $0x1c] sm:$0xf]
    %v75 = vld [vmem:[%s4] sm:$0x1]
    %v77 = vperm.slane %v75, 0
    %v87 = vunpack.c.l.b16 %v67
    %v88 = vunpack.c.l.b16 %v68
    %v89 = vunpack.c.l.b16 %v69
    %v90 = vunpack.c.l.b16 %v70
    %v91 = vunpack.c.l.b16 %v71
    %v92 = vunpack.c.l.b16 %v72
    %v93 = vunpack.c.l.b16 %v73
    %v94 = vunpack.c.l.b16 %v74
    %v95 = vpack.c.b16 %v88, %v87
    %v96 = vpack.c.b16 %v90, %v89
    %v97 = vpack.c.b16 %v92, %v91
    %v98 = vpack.c.b16 %v94, %v93
    %vm103 = vcmask 523264
    %v105 = vsel %vm103, %v65, 0
    %107 = vmatpush.bf16.msra.mxu0 0
    %108 = vmatpush.bf16.msra.mxu0 0
    %109 = vmatpush.bf16.msra.mxu0 0
    %110 = vmatpush.bf16.msra.mxu0 0
    %111 = vmatpush.bf16.msra.mxu0 %v98
    %112 = vmatpush.bf16.msra.mxu0 %v97
    %113 = vmatpush.bf16.msra.mxu0 %v96
    %114 = vmatpush.bf16.msra.mxu0 %v95
    %115 = vmatmul.bf16.gmra.mxu0 %v105
    %v116 = vpop.f32.mrf.mxu0
    %v117 = vadd.f32 %v77, %v116
    %v118 = vpop.f32.mrf.mxu0
    %v119 = vadd.f32 %v77, %v118
    %120 = vdwg.mxu0
    %v121 = vld [vmem:[%s5] sm:$0xf]
    %v122 = vld [vmem:[%s5 + $0x4] sm:$0xf]
    %v123 = vld [vmem:[%s5 + $0x8] sm:$0xf]
    %v124 = vld [vmem:[%s5 + $0xc] sm:$0xf]
    %v125 = vld [vmem:[%s5 + $0x10] sm:$0xf]
    %v126 = vld [vmem:[%s5 + $0x14] sm:$0xf]
    %v127 = vld [vmem:[%s5 + $0x18] sm:$0xf]
    %v128 = vld [vmem:[%s5 + $0x1c] sm:$0xf]
    %v129 = vld [vmem:[%s6] sm:$0x1]
    %v131 = vperm.slane %v129, 0
    %v141 = vunpack.c.l.b16 %v121
    %v142 = vunpack.c.l.b16 %v122
    %v143 = vunpack.c.l.b16 %v123
    %v144 = vunpack.c.l.b16 %v124
    %v145 = vunpack.c.l.b16 %v125
    %v146 = vunpack.c.l.b16 %v126
    %v147 = vunpack.c.l.b16 %v127
    %v148 = vunpack.c.l.b16 %v128
    %v149 = vpack.c.b16 %v142, %v141
    %v150 = vpack.c.b16 %v144, %v143
    %v151 = vpack.c.b16 %v146, %v145
    %v152 = vpack.c.b16 %v148, %v147
    %v158 = vsel %vm103, %v66, 0
    %160 = vmatpush.bf16.msra.mxu0 0
    %161 = vmatpush.bf16.msra.mxu0 0
    %162 = vmatpush.bf16.msra.mxu0 0
    %163 = vmatpush.bf16.msra.mxu0 0
    %164 = vmatpush.bf16.msra.mxu0 %v152
    %165 = vmatpush.bf16.msra.mxu0 %v151
    %166 = vmatpush.bf16.msra.mxu0 %v150
    %167 = vmatpush.bf16.msra.mxu0 %v149
    %168 = vmatmul.bf16.gmra.mxu0 %v158
    %v169 = vpop.f32.mrf.mxu0
    %v170 = vadd.f32 %v131, %v169
    %v171 = vpop.f32.mrf.mxu0
    %v172 = vadd.f32 %v131, %v171
    %173 = vdwg.mxu0
    %v174 = vpack.c.bf16 %v117, %v117
    %v175 = vpack.c.bf16 %v119, %v119
    %v176 = vpack.c.bf16 %v170, %v170
    %v177 = vpack.c.bf16 %v172, %v172
    %v179 = vunpack.c.l.b16 %v174
    %v180 = vpack.c.b16 %v179, %v179
    %181 = vrot.lane.b32.xlu0 %v180, 64
    %v182 = vpop.permute.xlu0 %181
    %vm183 = vcmask 261120
    %v185 = vsel %vm183, %v174, 0
    %v188 = vsel %vm183, %v182, 0
    %190 = vmatpush.bf16.xpose.msra.mxu0 0
    %191 = vmatpush.bf16.xpose.msra.mxu0 0
    %192 = vmatpush.bf16.xpose.msra.mxu0 0
    %193 = vmatpush.bf16.xpose.msra.mxu0 0
    %194 = vmatpush.bf16.xpose.msra.mxu0 0
    %195 = vmatpush.bf16.xpose.msra.mxu0 0
    %196 = vmatpush.bf16.xpose.msra.mxu0 0
    %197 = vmatpush.bf16.xpose.msra.mxu0 %v188
    %198 = vmatmul.bf16.gmra.mxu0 %v185
    %v199 = vpop.f32.mrf.mxu0
    %v200 = vadd.f32 %v62, %v199
    %v201 = vpop.f32.mrf.mxu0
    %202 = vdwg.mxu0
    %v204 = vunpack.c.l.b16 %v175
    %v205 = vpack.c.b16 %v204, %v204
    %206 = vrot.lane.b32.xlu0 %v205, 64
    %v207 = vpop.permute.xlu0 %206
    %v209 = vsel %vm183, %v175, 0
    %v212 = vsel %vm183, %v207, 0
    %214 = vmatpush.bf16.xpose.msra.mxu0 0
    %215 = vmatpush.bf16.xpose.msra.mxu0 0
    %216 = vmatpush.bf16.xpose.msra.mxu0 0
    %217 = vmatpush.bf16.xpose.msra.mxu0 0
    %218 = vmatpush.bf16.xpose.msra.mxu0 0
    %219 = vmatpush.bf16.xpose.msra.mxu0 0
    %220 = vmatpush.bf16.xpose.msra.mxu0 0
    %221 = vmatpush.bf16.xpose.msra.mxu0 %v212
    %222 = vmatmul.bf16.gmra.mxu0 %v209
    %v223 = vpop.f32.mrf.mxu0
    %v224 = vadd.f32 %v62, %v223
    %v225 = vpop.f32.mrf.mxu0
    %226 = vdwg.mxu0
    %vm227 = vcmask 64512
    %v228 = vsel %vm227, %v200, -inf
    %229 = vmax.xlane.f32.xlu0 %v228
    %v230 = vpop.xlane.xlu0 %229
    %v231 = vsel %vm227, %v224, -inf
    %232 = vmax.xlane.f32.xlu0 %v231
    %v233 = vpop.xlane.xlu0 %232
    %v234 = vsub.f32 %v200, %v230
    %v235 = vsub.f32 %v224, %v233
    %v236 = vmul.f32 %v234, 1.442695
    %v237 = vpow.pop %v236
    %v238 = vmul.f32 %v235, 1.442695
    %v239 = vpow.pop %v238
    %v240 = vsel %vm227, %v237, 0.0
    %241 = vadd.xlane.f32.xlu0 %v240
    %v242 = vpop.xlane.xlu0 %241
    %v243 = vsel %vm227, %v239, 0.0
    %244 = vadd.xlane.f32.xlu0 %v243
    %v245 = vpop.xlane.xlu0 %244
    %v246 = vrcp.pop %v242
    %v247 = vrcp.pop %v245
    %v248 = vmul.f32 %v237, %v246
    %v249 = vmul.f32 %v239, %v247
    %v250 = vpack.c.bf16 %v248, %v248
    %v251 = vpack.c.bf16 %v249, %v249
    %v253 = vsel %vm227, %v250, 0
    %vm255 = vcmask 1043456
    %v257 = vsel %vm255, %v176, 0
    %259 = vmatpush.bf16.msra.mxu0 0
    %260 = vmatpush.bf16.msra.mxu0 0
    %261 = vmatpush.bf16.msra.mxu0 0
    %262 = vmatpush.bf16.msra.mxu0 0
    %263 = vmatpush.bf16.msra.mxu0 0
    %264 = vmatpush.bf16.msra.mxu0 0
    %265 = vmatpush.bf16.msra.mxu0 0
    %266 = vmatpush.bf16.msra.mxu0 %v257
    %267 = vmatmul.bf16.gmra.mxu0 %v253
    %v268 = vpop.f32.mrf.mxu0
    %v269 = vadd.f32 0.0, %v268
    %v270 = vpop.f32.mrf.mxu0
    %271 = vdwg.mxu0
    %v273 = vsel %vm227, %v251, 0
    %v276 = vsel %vm255, %v177, 0
    %278 = vmatpush.bf16.msra.mxu0 0
    %279 = vmatpush.bf16.msra.mxu0 0
    %280 = vmatpush.bf16.msra.mxu0 0
    %281 = vmatpush.bf16.msra.mxu0 0
    %282 = vmatpush.bf16.msra.mxu0 0
    %283 = vmatpush.bf16.msra.mxu0 0
    %284 = vmatpush.bf16.msra.mxu0 0
    %285 = vmatpush.bf16.msra.mxu0 %v276
    %286 = vmatmul.bf16.gmra.mxu0 %v273
    %v287 = vpop.f32.mrf.mxu0
    %v288 = vadd.f32 0.0, %v287
    %v289 = vpop.f32.mrf.mxu0
    %290 = vdwg.mxu0
    %291 = vrot.lane.b32.xlu0 %v180, 96
    %v292 = vpop.permute.xlu0 %291
    %293 = vrot.lane.b32.xlu0 %v180, 32
    %v294 = vpop.permute.xlu0 %293
    %v296 = vsel %vm183, %v292, 0
    %v299 = vsel %vm183, %v294, 0
    %301 = vmatpush.bf16.xpose.msra.mxu0 0
    %302 = vmatpush.bf16.xpose.msra.mxu0 0
    %303 = vmatpush.bf16.xpose.msra.mxu0 0
    %304 = vmatpush.bf16.xpose.msra.mxu0 0
    %305 = vmatpush.bf16.xpose.msra.mxu0 0
    %306 = vmatpush.bf16.xpose.msra.mxu0 0
    %307 = vmatpush.bf16.xpose.msra.mxu0 0
    %308 = vmatpush.bf16.xpose.msra.mxu0 %v299
    %309 = vmatmul.bf16.gmra.mxu0 %v296
    %v310 = vpop.f32.mrf.mxu0
    %v311 = vadd.f32 %v62, %v310
    %v312 = vpop.f32.mrf.mxu0
    %313 = vdwg.mxu0
    %314 = vrot.lane.b32.xlu0 %v205, 96
    %v315 = vpop.permute.xlu0 %314
    %316 = vrot.lane.b32.xlu0 %v205, 32
    %v317 = vpop.permute.xlu0 %316
    %v319 = vsel %vm183, %v315, 0
    %v322 = vsel %vm183, %v317, 0
    %324 = vmatpush.bf16.xpose.msra.mxu0 0
    %325 = vmatpush.bf16.xpose.msra.mxu0 0
    %326 = vmatpush.bf16.xpose.msra.mxu0 0
    %327 = vmatpush.bf16.xpose.msra.mxu0 0
    %328 = vmatpush.bf16.xpose.msra.mxu0 0
    %329 = vmatpush.bf16.xpose.msra.mxu0 0
    %330 = vmatpush.bf16.xpose.msra.mxu0 0
    %331 = vmatpush.bf16.xpose.msra.mxu0 %v322
    %332 = vmatmul.bf16.gmra.mxu0 %v319
    %v333 = vpop.f32.mrf.mxu0
    %v334 = vadd.f32 %v62, %v333
    %v335 = vpop.f32.mrf.mxu0
    %336 = vdwg.mxu0
    %v337 = vsel %vm227, %v311, -inf
    %338 = vmax.xlane.f32.xlu0 %v337
    %v339 = vpop.xlane.xlu0 %338
    %v340 = vsel %vm227, %v334, -inf
    %341 = vmax.xlane.f32.xlu0 %v340
    %v342 = vpop.xlane.xlu0 %341
    %v343 = vsub.f32 %v311, %v339
    %v344 = vsub.f32 %v334, %v342
    %v345 = vmul.f32 %v343, 1.442695
    %v346 = vpow.pop %v345
    %v347 = vmul.f32 %v344, 1.442695
    %v348 = vpow.pop %v347
    %v349 = vsel %vm227, %v346, 0.0
    %350 = vadd.xlane.f32.xlu0 %v349
    %v351 = vpop.xlane.xlu0 %350
    %v352 = vsel %vm227, %v348, 0.0
    %353 = vadd.xlane.f32.xlu0 %v352
    %v354 = vpop.xlane.xlu0 %353
    %v355 = vrcp.pop %v351
    %v356 = vrcp.pop %v354
    %v357 = vmul.f32 %v346, %v355
    %v358 = vmul.f32 %v348, %v356
    %v359 = vpack.c.bf16 %v357, %v357
    %v360 = vpack.c.bf16 %v358, %v358
    %v362 = vunpack.c.l.b16 %v176
    %v363 = vpack.c.b16 %v362, %v362
    %364 = vrot.lane.b32.xlu0 %v363, 96
    %v365 = vpop.permute.xlu0 %364
    %v367 = vsel %vm227, %v359, 0
    %v370 = vsel %vm255, %v365, 0
    %372 = vmatpush.bf16.msra.mxu0 0
    %373 = vmatpush.bf16.msra.mxu0 0
    %374 = vmatpush.bf16.msra.mxu0 0
    %375 = vmatpush.bf16.msra.mxu0 0
    %376 = vmatpush.bf16.msra.mxu0 0
    %377 = vmatpush.bf16.msra.mxu0 0
    %378 = vmatpush.bf16.msra.mxu0 0
    %379 = vmatpush.bf16.msra.mxu0 %v370
    %380 = vmatmul.bf16.gmra.mxu0 %v367
    %v381 = vpop.f32.mrf.mxu0
    %v382 = vadd.f32 0.0, %v381
    %v383 = vpop.f32.mrf.mxu0
    %384 = vdwg.mxu0
    %v386 = vunpack.c.l.b16 %v177
    %v387 = vpack.c.b16 %v386, %v386
    %388 = vrot.lane.b32.xlu0 %v387, 96
    %v389 = vpop.permute.xlu0 %388
    %v391 = vsel %vm227, %v360, 0
    %v394 = vsel %vm255, %v389, 0
    %396 = vmatpush.bf16.msra.mxu0 0
    %397 = vmatpush.bf16.msra.mxu0 0
    %398 = vmatpush.bf16.msra.mxu0 0
    %399 = vmatpush.bf16.msra.mxu0 0
    %400 = vmatpush.bf16.msra.mxu0 0
    %401 = vmatpush.bf16.msra.mxu0 0
    %402 = vmatpush.bf16.msra.mxu0 0
    %403 = vmatpush.bf16.msra.mxu0 %v394
    %404 = vmatmul.bf16.gmra.mxu0 %v391
    %v405 = vpop.f32.mrf.mxu0
    %v406 = vadd.f32 0.0, %v405
    %v407 = vpop.f32.mrf.mxu0
    %408 = vdwg.mxu0
    %411 = vrot.lane.b32.xlu0 %v382, 32
    %v412 = vpop.permute.xlu0 %411
    %413 = vrot.lane.b32.xlu0 %v406, 32
    %v414 = vpop.permute.xlu0 %413
    %v417 = vsel %vm183, %v269, %v412
    %v418 = vsel %vm183, %v288, %v414
    %v419 = vpack.c.bf16 %v418, %v417
    %v420 = vld [vmem:[%s7] sm:$0xf]
    %v421 = vld [vmem:[%s7 + $0x4] sm:$0xf]
    %v422 = vld [vmem:[%s7 + $0x8] sm:$0xf]
    %v423 = vld [vmem:[%s7 + $0xc] sm:$0xf]
    %v424 = vld [vmem:[%s7 + $0x10] sm:$0xf]
    %v425 = vld [vmem:[%s7 + $0x14] sm:$0xf]
    %v426 = vld [vmem:[%s7 + $0x18] sm:$0xf]
    %v427 = vld [vmem:[%s7 + $0x1c] sm:$0xf]
    %v428 = vld [vmem:[%s8] sm:$0x1]
    %v430 = vperm.slane %v428, 0
    %v440 = vunpack.c.l.b16 %v420
    %v441 = vunpack.c.l.b16 %v421
    %v442 = vunpack.c.l.b16 %v422
    %v443 = vunpack.c.l.b16 %v423
    %v444 = vunpack.c.l.b16 %v424
    %v445 = vunpack.c.l.b16 %v425
    %v446 = vunpack.c.l.b16 %v426
    %v447 = vunpack.c.l.b16 %v427
    %v448 = vpack.c.b16 %v441, %v440
    %v449 = vpack.c.b16 %v443, %v442
    %v450 = vpack.c.b16 %v445, %v444
    %v451 = vpack.c.b16 %v447, %v446
    %v457 = vsel %vm103, %v419, 0
    %459 = vmatpush.bf16.msra.mxu0 0
    %460 = vmatpush.bf16.msra.mxu0 0
    %461 = vmatpush.bf16.msra.mxu0 0
    %462 = vmatpush.bf16.msra.mxu0 0
    %463 = vmatpush.bf16.msra.mxu0 %v451
    %464 = vmatpush.bf16.msra.mxu0 %v450
    %465 = vmatpush.bf16.msra.mxu0 %v449
    %466 = vmatpush.bf16.msra.mxu0 %v448
    %467 = vmatmul.bf16.gmra.mxu0 %v457
    %v468 = vpop.f32.mrf.mxu0
    %v469 = vadd.f32 %v430, %v468
    %v470 = vpop.f32.mrf.mxu0
    %v471 = vadd.f32 %v430, %v470
    %472 = vdwg.mxu0
    %v473 = vadd.f32 %v469, %v58
    %v474 = vadd.f32 %v471, %v59
    %v475 = vld [vmem:[%s9] sm:$0x1]
    %v476 = vld [vmem:[%s10] sm:$0x1]
    %v477 = vsel %vm103, %v473, 0.0
    %478 = vadd.xlane.f32.xlu0 %v477
    %v479 = vpop.xlane.xlu0 %478
    %v480 = vsel %vm103, %v474, 0.0
    %481 = vadd.xlane.f32.xlu0 %v480
    %v482 = vpop.xlane.xlu0 %481
    %v483 = vrcp.pop 64.0
    %v484 = vmul.f32 64.0, %v483
    %v485 = vsub.f32 1.0, %v484
    %v486 = vmul.f32 %v483, %v485
    %v487 = vadd.f32 %v483, %v486
    %vm488 = vweird.f32 %v483
    %v489 = vsel %vm488, %v483, %v487
    %v490 = vmul.f32 %v479, %v489
    %v491 = vmul.f32 %v482, %v489
    %v492 = vsub.f32 %v473, %v490
    %v493 = vsub.f32 %v474, %v491
    %v494 = vmul.f32 %v492, %v492
    %v495 = vmul.f32 %v493, %v493
    %v496 = vsel %vm103, %v494, 0.0
    %497 = vadd.xlane.f32.xlu0 %v496
    %v498 = vpop.xlane.xlu0 %497
    %v499 = vsel %vm103, %v495, 0.0
    %500 = vadd.xlane.f32.xlu0 %v499
    %v501 = vpop.xlane.xlu0 %500
    %v502 = vmul.f32 %v498, %v489
    %v503 = vmul.f32 %v501, %v489
    %v504 = vadd.f32 %v502, 1e-12
    %v505 = vadd.f32 %v503, 1e-12
    %v506 = vrsqrt.pop %v504
    %v507 = vmul.f32 %v506, %v504
    %v508 = vmul.f32 %v507, %v506
    %v509 = vmul.f32 0.5, %v508
    %v510 = vsub.f32 1.5, %v509
    %v511 = vmul.f32 %v506, %v510
    %vm512 = vweird.f32 %v504
    %vm513 = vweird.f32 %v506
    %vm514 = vmor %vm512, %vm513
    %v515 = vsel %vm514, %v506, %v511
    %v516 = vrsqrt.pop %v505
    %v517 = vmul.f32 %v516, %v505
    %v518 = vmul.f32 %v517, %v516
    %v519 = vmul.f32 0.5, %v518
    %v520 = vsub.f32 1.5, %v519
    %v521 = vmul.f32 %v516, %v520
    %vm522 = vweird.f32 %v505
    %vm523 = vweird.f32 %v516
    %vm524 = vmor %vm522, %vm523
    %v525 = vsel %vm524, %v516, %v521
    %v526 = vmul.f32 %v492, %v515
    %v527 = vmul.f32 %v493, %v525
    %v529 = vperm.slane %v475, 0
    %v531 = vmul.f32 %v526, %v529
    %v532 = vmul.f32 %v527, %v529
    %v534 = vperm.slane %v476, 0
    %v536 = vadd.f32 %v531, %v534
    %v537 = vadd.f32 %v532, %v534
    %v538 = vpack.c.bf16 %v537, %v536
    %v539 = vld [vmem:[%s11] sm:$0xff]
    %v540 = vld [vmem:[%s11 + $0x8] sm:$0xff]
    %v541 = vld [vmem:[%s11 + $0x10] sm:$0xff]
    %v542 = vld [vmem:[%s11 + $0x18] sm:$0xff]
    %v543 = vld [vmem:[%s11 + $0x20] sm:$0xff]
    %v544 = vld [vmem:[%s11 + $0x28] sm:$0xff]
    %v545 = vld [vmem:[%s11 + $0x30] sm:$0xff]
    %v546 = vld [vmem:[%s11 + $0x38] sm:$0xff]
    %v547 = vld [vmem:[%s12] sm:$0x3]
    %v549 = vperm.slane %v547, 0
    %v550 = vperm.slane %v547, 1
    %v561 = vunpack.c.l.b16 %v539
    %v562 = vunpack.c.h.b16 %v539
    %v563 = vunpack.c.l.b16 %v540
    %v564 = vunpack.c.h.b16 %v540
    %v565 = vunpack.c.l.b16 %v541
    %v566 = vunpack.c.h.b16 %v541
    %v567 = vunpack.c.l.b16 %v542
    %v568 = vunpack.c.h.b16 %v542
    %v569 = vunpack.c.l.b16 %v543
    %v570 = vunpack.c.h.b16 %v543
    %v571 = vunpack.c.l.b16 %v544
    %v572 = vunpack.c.h.b16 %v544
    %v573 = vunpack.c.l.b16 %v545
    %v574 = vunpack.c.h.b16 %v545
    %v575 = vunpack.c.l.b16 %v546
    %v576 = vunpack.c.h.b16 %v546
    %v577 = vpack.c.b16 %v563, %v561
    %v578 = vpack.c.b16 %v564, %v562
    %v579 = vpack.c.b16 %v567, %v565
    %v580 = vpack.c.b16 %v568, %v566
    %v581 = vpack.c.b16 %v571, %v569
    %v582 = vpack.c.b16 %v572, %v570
    %v583 = vpack.c.b16 %v575, %v573
    %v584 = vpack.c.b16 %v576, %v574
    %v594 = vsel %vm103, %v538, 0
    %596 = vmatpush.bf16.msra.mxu0 0
    %597 = vmatpush.bf16.msra.mxu0 0
    %598 = vmatpush.bf16.msra.mxu0 0
    %599 = vmatpush.bf16.msra.mxu0 0
    %600 = vmatpush.bf16.msra.mxu0 %v583
    %601 = vmatpush.bf16.msra.mxu0 %v581
    %602 = vmatpush.bf16.msra.mxu0 %v579
    %603 = vmatpush.bf16.msra.mxu0 %v577
    %604 = vmatmul.bf16.gmra.mxu0 %v594
    %v605 = vpop.f32.mrf.mxu0
    %v606 = vadd.f32 %v549, %v605
    %v607 = vpop.f32.mrf.mxu0
    %v608 = vadd.f32 %v549, %v607
    %609 = vdwg.mxu0
    %610 = vmatpush.bf16.msra.mxu0 0
    %611 = vmatpush.bf16.msra.mxu0 0
    %612 = vmatpush.bf16.msra.mxu0 0
    %613 = vmatpush.bf16.msra.mxu0 0
    %614 = vmatpush.bf16.msra.mxu0 %v584
    %615 = vmatpush.bf16.msra.mxu0 %v582
    %616 = vmatpush.bf16.msra.mxu0 %v580
    %617 = vmatpush.bf16.msra.mxu0 %v578
    %618 = vmatmul.bf16.gmra.mxu0 %v594
    %v619 = vpop.f32.mrf.mxu0
    %v620 = vadd.f32 %v550, %v619
    %v621 = vpop.f32.mrf.mxu0
    %v622 = vadd.f32 %v550, %v621
    %623 = vdwg.mxu0
    %v624 = vmul.f32 %v606, 0.5
    %v625 = vmul.f32 %v620, 0.5
    %v626 = vmul.f32 %v608, 0.5
    %v627 = vmul.f32 %v622, 0.5
    %v628 = vrcp.pop 1.4142135
    %v629 = vmul.f32 1.4142135, %v628
    %v630 = vsub.f32 1.0, %v629
    %v631 = vmul.f32 %v628, %v630
    %v632 = vadd.f32 %v628, %v631
    %vm633 = vweird.f32 %v628
    %v634 = vsel %vm633, %v628, %v632
    %v635 = vmul.f32 %v606, %v634
    %v636 = vmul.f32 %v620, %v634
    %v637 = vmul.f32 %v608, %v634
    %v638 = vmul.f32 %v622, %v634
    %v639 = vmul.f32 %v635, %v635
    %v640 = vmin.f32 16.0, %v639
    %v641 = vmul.f32 %v640, 2.1237322e-06
    %v642 = vadd.f32 %v641, 0.00028619796
    %v643 = vmul.f32 %v640, %v642
    %v644 = vadd.f32 %v643, 0.0036580483
    %v645 = vmul.f32 %v640, %v644
    %v646 = vadd.f32 %v645, 0.05243302
    %v647 = vmul.f32 %v640, %v646
    %v648 = vadd.f32 %v647, 0.18741608
    %v649 = vmul.f32 %v640, %v648
    %v650 = vadd.f32 %v649, 1.1283791
    %v651 = vmul.f32 %v635, %v650
    %v652 = vmul.f32 %v640, 3.8918573e-05
    %v653 = vadd.f32 %v652, 0.001143296
    %v654 = vmul.f32 %v640, %v653
    %v655 = vadd.f32 %v654, 0.014752088
    %v656 = vmul.f32 %v640, %v655
    %v657 = vadd.f32 %v656, 0.112945676
    %v658 = vmul.f32 %v640, %v657
    %v659 = vadd.f32 %v658, 0.4994258
    %v660 = vmul.f32 %v640, %v659
    %v661 = vadd.f32 %v660, 1.0
    %v662 = vrcp.pop %v661
    %v663 = vmul.f32 %v661, %v662
    %v664 = vsub.f32 1.0, %v663
    %v665 = vmul.f32 %v662, %v664
    %v666 = vadd.f32 %v662, %v665
    %vm667 = vweird.f32 %v661
    %vm668 = vweird.f32 %v662
    %vm669 = vmor %vm667, %vm668
    %v670 = vsel %vm669, %v662, %v666
    %v671 = vand.u32 2147483647, %v661
    %vm672 = vcmp.eq.f32.partialorder %v671, 8.507059e+37
    %v673 = vand.u32 %v661, 2147483648
    %v674 = vor.u32 1.1754944e-38, %v673
    %v675 = vsel %vm672, %v674, %v670
    %v676 = vmul.f32 %v651, %v675
    %v677 = vmin.f32 %v676, 1.0
    %v678 = vmax.f32 %v677, -1.0
    %v679 = vmul.f32 %v636, %v636
    %v680 = vmin.f32 16.0, %v679
    %v681 = vmul.f32 %v680, 2.1237322e-06
    %v682 = vadd.f32 %v681, 0.00028619796
    %v683 = vmul.f32 %v680, %v682
    %v684 = vadd.f32 %v683, 0.0036580483
    %v685 = vmul.f32 %v680, %v684
    %v686 = vadd.f32 %v685, 0.05243302
    %v687 = vmul.f32 %v680, %v686
    %v688 = vadd.f32 %v687, 0.18741608
    %v689 = vmul.f32 %v680, %v688
    %v690 = vadd.f32 %v689, 1.1283791
    %v691 = vmul.f32 %v636, %v690
    %v692 = vmul.f32 %v680, 3.8918573e-05
    %v693 = vadd.f32 %v692, 0.001143296
    %v694 = vmul.f32 %v680, %v693
    %v695 = vadd.f32 %v694, 0.014752088
    %v696 = vmul.f32 %v680, %v695
    %v697 = vadd.f32 %v696, 0.112945676
    %v698 = vmul.f32 %v680, %v697
    %v699 = vadd.f32 %v698, 0.4994258
    %v700 = vmul.f32 %v680, %v699
    %v701 = vadd.f32 %v700, 1.0
    %v702 = vrcp.pop %v701
    %v703 = vmul.f32 %v701, %v702
    %v704 = vsub.f32 1.0, %v703
    %v705 = vmul.f32 %v702, %v704
    %v706 = vadd.f32 %v702, %v705
    %vm707 = vweird.f32 %v701
    %vm708 = vweird.f32 %v702
    %vm709 = vmor %vm707, %vm708
    %v710 = vsel %vm709, %v702, %v706
    %v711 = vand.u32 2147483647, %v701
    %vm712 = vcmp.eq.f32.partialorder %v711, 8.507059e+37
    %v713 = vand.u32 %v701, 2147483648
    %v714 = vor.u32 1.1754944e-38, %v713
    %v715 = vsel %vm712, %v714, %v710
    %v716 = vmul.f32 %v691, %v715
    %v717 = vmin.f32 %v716, 1.0
    %v718 = vmax.f32 %v717, -1.0
    %v719 = vmul.f32 %v637, %v637
    %v720 = vmin.f32 16.0, %v719
    %v721 = vmul.f32 %v720, 2.1237322e-06
    %v722 = vadd.f32 %v721, 0.00028619796
    %v723 = vmul.f32 %v720, %v722
    %v724 = vadd.f32 %v723, 0.0036580483
    %v725 = vmul.f32 %v720, %v724
    %v726 = vadd.f32 %v725, 0.05243302
    %v727 = vmul.f32 %v720, %v726
    %v728 = vadd.f32 %v727, 0.18741608
    %v729 = vmul.f32 %v720, %v728
    %v730 = vadd.f32 %v729, 1.1283791
    %v731 = vmul.f32 %v637, %v730
    %v732 = vmul.f32 %v720, 3.8918573e-05
    %v733 = vadd.f32 %v732, 0.001143296
    %v734 = vmul.f32 %v720, %v733
    %v735 = vadd.f32 %v734, 0.014752088
    %v736 = vmul.f32 %v720, %v735
    %v737 = vadd.f32 %v736, 0.112945676
    %v738 = vmul.f32 %v720, %v737
    %v739 = vadd.f32 %v738, 0.4994258
    %v740 = vmul.f32 %v720, %v739
    %v741 = vadd.f32 %v740, 1.0
    %v742 = vrcp.pop %v741
    %v743 = vmul.f32 %v741, %v742
    %v744 = vsub.f32 1.0, %v743
    %v745 = vmul.f32 %v742, %v744
    %v746 = vadd.f32 %v742, %v745
    %vm747 = vweird.f32 %v741
    %vm748 = vweird.f32 %v742
    %vm749 = vmor %vm747, %vm748
    %v750 = vsel %vm749, %v742, %v746
    %v751 = vand.u32 2147483647, %v741
    %vm752 = vcmp.eq.f32.partialorder %v751, 8.507059e+37
    %v753 = vand.u32 %v741, 2147483648
    %v754 = vor.u32 1.1754944e-38, %v753
    %v755 = vsel %vm752, %v754, %v750
    %v756 = vmul.f32 %v731, %v755
    %v757 = vmin.f32 %v756, 1.0
    %v758 = vmax.f32 %v757, -1.0
    %v759 = vmul.f32 %v638, %v638
    %v760 = vmin.f32 16.0, %v759
    %v761 = vmul.f32 %v760, 2.1237322e-06
    %v762 = vadd.f32 %v761, 0.00028619796
    %v763 = vmul.f32 %v760, %v762
    %v764 = vadd.f32 %v763, 0.0036580483
    %v765 = vmul.f32 %v760, %v764
    %v766 = vadd.f32 %v765, 0.05243302
    %v767 = vmul.f32 %v760, %v766
    %v768 = vadd.f32 %v767, 0.18741608
    %v769 = vmul.f32 %v760, %v768
    %v770 = vadd.f32 %v769, 1.1283791
    %v771 = vmul.f32 %v638, %v770
    %v772 = vmul.f32 %v760, 3.8918573e-05
    %v773 = vadd.f32 %v772, 0.001143296
    %v774 = vmul.f32 %v760, %v773
    %v775 = vadd.f32 %v774, 0.014752088
    %v776 = vmul.f32 %v760, %v775
    %v777 = vadd.f32 %v776, 0.112945676
    %v778 = vmul.f32 %v760, %v777
    %v779 = vadd.f32 %v778, 0.4994258
    %v780 = vmul.f32 %v760, %v779
    %v781 = vadd.f32 %v780, 1.0
    %v782 = vrcp.pop %v781
    %v783 = vmul.f32 %v781, %v782
    %v784 = vsub.f32 1.0, %v783
    %v785 = vmul.f32 %v782, %v784
    %v786 = vadd.f32 %v782, %v785
    %vm787 = vweird.f32 %v781
    %vm788 = vweird.f32 %v782
    %vm789 = vmor %vm787, %vm788
    %v790 = vsel %vm789, %v782, %v786
    %v791 = vand.u32 2147483647, %v781
    %vm792 = vcmp.eq.f32.partialorder %v791, 8.507059e+37
    %v793 = vand.u32 %v781, 2147483648
    %v794 = vor.u32 1.1754944e-38, %v793
    %v795 = vsel %vm792, %v794, %v790
    %v796 = vmul.f32 %v771, %v795
    %v797 = vmin.f32 %v796, 1.0
    %v798 = vmax.f32 %v797, -1.0
    %v799 = vadd.f32 %v678, 1.0
    %v800 = vadd.f32 %v718, 1.0
    %v801 = vadd.f32 %v758, 1.0
    %v802 = vadd.f32 %v798, 1.0
    %v803 = vmul.f32 %v624, %v799
    %v804 = vmul.f32 %v625, %v800
    %v805 = vmul.f32 %v626, %v801
    %v806 = vmul.f32 %v627, %v802
    %v807 = vpack.c.bf16 %v805, %v803
    %v808 = vpack.c.bf16 %v806, %v804
    %v809 = vld [vmem:[%s13] sm:$0xf]
    %v810 = vld [vmem:[%s13 + $0x4] sm:$0xf]
    %v811 = vld [vmem:[%s13 + $0x8] sm:$0xf]
    %v812 = vld [vmem:[%s13 + $0xc] sm:$0xf]
    %v813 = vld [vmem:[%s13 + $0x10] sm:$0xf]
    %v814 = vld [vmem:[%s13 + $0x14] sm:$0xf]
    %v815 = vld [vmem:[%s13 + $0x18] sm:$0xf]
    %v816 = vld [vmem:[%s13 + $0x1c] sm:$0xf]
    %v817 = vld [vmem:[%s13 + $0x20] sm:$0xf]
    %v818 = vld [vmem:[%s13 + $0x24] sm:$0xf]
    %v819 = vld [vmem:[%s13 + $0x28] sm:$0xf]
    %v820 = vld [vmem:[%s13 + $0x2c] sm:$0xf]
    %v821 = vld [vmem:[%s13 + $0x30] sm:$0xf]
    %v822 = vld [vmem:[%s13 + $0x34] sm:$0xf]
    %v823 = vld [vmem:[%s13 + $0x38] sm:$0xf]
    %v824 = vld [vmem:[%s13 + $0x3c] sm:$0xf]
    %v825 = vld [vmem:[%s13 + $0x40] sm:$0xf]
    %v826 = vld [vmem:[%s13 + $0x44] sm:$0xf]
    %v827 = vld [vmem:[%s13 + $0x48] sm:$0xf]
    %v828 = vld [vmem:[%s13 + $0x4c] sm:$0xf]
    %v829 = vld [vmem:[%s13 + $0x50] sm:$0xf]
    %v830 = vld [vmem:[%s13 + $0x54] sm:$0xf]
    %v831 = vld [vmem:[%s13 + $0x58] sm:$0xf]
    %v832 = vld [vmem:[%s13 + $0x5c] sm:$0xf]
    %v833 = vld [vmem:[%s13 + $0x60] sm:$0xf]
    %v834 = vld [vmem:[%s13 + $0x64] sm:$0xf]
    %v835 = vld [vmem:[%s13 + $0x68] sm:$0xf]
    %v836 = vld [vmem:[%s13 + $0x6c] sm:$0xf]
    %v837 = vld [vmem:[%s13 + $0x70] sm:$0xf]
    %v838 = vld [vmem:[%s13 + $0x74] sm:$0xf]
    %v839 = vld [vmem:[%s13 + $0x78] sm:$0xf]
    %v840 = vld [vmem:[%s13 + $0x7c] sm:$0xf]
    %v841 = vld [vmem:[%s14] sm:$0x1]
    %v843 = vperm.slane %v841, 0
    %v877 = vunpack.c.l.b16 %v809
    %v878 = vunpack.c.l.b16 %v810
    %v879 = vunpack.c.l.b16 %v811
    %v880 = vunpack.c.l.b16 %v812
    %v881 = vunpack.c.l.b16 %v813
    %v882 = vunpack.c.l.b16 %v814
    %v883 = vunpack.c.l.b16 %v815
    %v884 = vunpack.c.l.b16 %v816
    %v885 = vunpack.c.l.b16 %v817
    %v886 = vunpack.c.l.b16 %v818
    %v887 = vunpack.c.l.b16 %v819
    %v888 = vunpack.c.l.b16 %v820
    %v889 = vunpack.c.l.b16 %v821
    %v890 = vunpack.c.l.b16 %v822
    %v891 = vunpack.c.l.b16 %v823
    %v892 = vunpack.c.l.b16 %v824
    %v893 = vunpack.c.l.b16 %v825
    %v894 = vunpack.c.l.b16 %v826
    %v895 = vunpack.c.l.b16 %v827
    %v896 = vunpack.c.l.b16 %v828
    %v897 = vunpack.c.l.b16 %v829
    %v898 = vunpack.c.l.b16 %v830
    %v899 = vunpack.c.l.b16 %v831
    %v900 = vunpack.c.l.b16 %v832
    %v901 = vunpack.c.l.b16 %v833
    %v902 = vunpack.c.l.b16 %v834
    %v903 = vunpack.c.l.b16 %v835
    %v904 = vunpack.c.l.b16 %v836
    %v905 = vunpack.c.l.b16 %v837
    %v906 = vunpack.c.l.b16 %v838
    %v907 = vunpack.c.l.b16 %v839
    %v908 = vunpack.c.l.b16 %v840
    %v909 = vpack.c.b16 %v878, %v877
    %v910 = vpack.c.b16 %v880, %v879
    %v911 = vpack.c.b16 %v882, %v881
    %v912 = vpack.c.b16 %v884, %v883
    %v913 = vpack.c.b16 %v886, %v885
    %v914 = vpack.c.b16 %v888, %v887
    %v915 = vpack.c.b16 %v890, %v889
    %v916 = vpack.c.b16 %v892, %v891
    %v917 = vpack.c.b16 %v894, %v893
    %v918 = vpack.c.b16 %v896, %v895
    %v919 = vpack.c.b16 %v898, %v897
    %v920 = vpack.c.b16 %v900, %v899
    %v921 = vpack.c.b16 %v902, %v901
    %v922 = vpack.c.b16 %v904, %v903
    %v923 = vpack.c.b16 %v906, %v905
    %v924 = vpack.c.b16 %v908, %v907
    %941 = vmatpush.bf16.msra.mxu0 %v916
    %942 = vmatpush.bf16.msra.mxu0 %v915
    %943 = vmatpush.bf16.msra.mxu0 %v914
    %944 = vmatpush.bf16.msra.mxu0 %v913
    %945 = vmatpush.bf16.msra.mxu0 %v912
    %946 = vmatpush.bf16.msra.mxu0 %v911
    %947 = vmatpush.bf16.msra.mxu0 %v910
    %948 = vmatpush.bf16.msra.mxu0 %v909
    %949 = vmatmul.bf16.gmra.mxu0 %v807
    %v950 = vpop.f32.mrf.mxu0
    %v951 = vadd.f32 %v843, %v950
    %v952 = vpop.f32.mrf.mxu0
    %v953 = vadd.f32 %v843, %v952
    %954 = vdwg.mxu0
    %955 = vmatpush.bf16.msra.mxu0 %v924
    %956 = vmatpush.bf16.msra.mxu0 %v923
    %957 = vmatpush.bf16.msra.mxu0 %v922
    %958 = vmatpush.bf16.msra.mxu0 %v921
    %959 = vmatpush.bf16.msra.mxu0 %v920
    %960 = vmatpush.bf16.msra.mxu0 %v919
    %961 = vmatpush.bf16.msra.mxu0 %v918
    %962 = vmatpush.bf16.msra.mxu0 %v917
    %963 = vmatmul.bf16.gmra.mxu0 %v808
    %v964 = vpop.f32.mrf.mxu0
    %v965 = vadd.f32 %v951, %v964
    %v966 = vpop.f32.mrf.mxu0
    %v967 = vadd.f32 %v953, %v966
    %968 = vdwg.mxu0
    %v969 = vadd.f32 %v965, %v536
    %v970 = vadd.f32 %v967, %v537
    %v971 = vld [vmem:[%s15] sm:$0x1]
    %v972 = vld [vmem:[%s16] sm:$0x1]
    %v973 = vsel %vm103, %v969, 0.0
    %974 = vadd.xlane.f32.xlu0 %v973
    %v975 = vpop.xlane.xlu0 %974
    %v976 = vsel %vm103, %v970, 0.0
    %977 = vadd.xlane.f32.xlu0 %v976
    %v978 = vpop.xlane.xlu0 %977
    %v979 = vmul.f32 %v975, %v489
    %v980 = vmul.f32 %v978, %v489
    %v981 = vsub.f32 %v969, %v979
    %v982 = vsub.f32 %v970, %v980
    %v983 = vmul.f32 %v981, %v981
    %v984 = vmul.f32 %v982, %v982
    %v985 = vsel %vm103, %v983, 0.0
    %986 = vadd.xlane.f32.xlu0 %v985
    %v987 = vpop.xlane.xlu0 %986
    %v988 = vsel %vm103, %v984, 0.0
    %989 = vadd.xlane.f32.xlu0 %v988
    %v990 = vpop.xlane.xlu0 %989
    %v991 = vmul.f32 %v987, %v489
    %v992 = vmul.f32 %v990, %v489
    %v993 = vadd.f32 %v991, 1e-12
    %v994 = vadd.f32 %v992, 1e-12
    %v995 = vrsqrt.pop %v993
    %v996 = vmul.f32 %v995, %v993
    %v997 = vmul.f32 %v996, %v995
    %v998 = vmul.f32 0.5, %v997
    %v999 = vsub.f32 1.5, %v998
    %v1000 = vmul.f32 %v995, %v999
    %vm1001 = vweird.f32 %v993
    %vm1002 = vweird.f32 %v995
    %vm1003 = vmor %vm1001, %vm1002
    %v1004 = vsel %vm1003, %v995, %v1000
    %v1005 = vrsqrt.pop %v994
    %v1006 = vmul.f32 %v1005, %v994
    %v1007 = vmul.f32 %v1006, %v1005
    %v1008 = vmul.f32 0.5, %v1007
    %v1009 = vsub.f32 1.5, %v1008
    %v1010 = vmul.f32 %v1005, %v1009
    %vm1011 = vweird.f32 %v994
    %vm1012 = vweird.f32 %v1005
    %vm1013 = vmor %vm1011, %vm1012
    %v1014 = vsel %vm1013, %v1005, %v1010
    %v1015 = vmul.f32 %v981, %v1004
    %v1016 = vmul.f32 %v982, %v1014
    %v1018 = vperm.slane %v971, 0
    %v1020 = vmul.f32 %v1015, %v1018
    %v1021 = vmul.f32 %v1016, %v1018
    %v1023 = vperm.slane %v972, 0
    %v1025 = vadd.f32 %v1020, %v1023
    %v1026 = vadd.f32 %v1021, %v1023
    %1027 = vst.msk [vmem:[#allocation2] sm:$0xff] %vm103, %v1025
    %1028 = vst.msk [vmem:[#allocation2 + $0x8] sm:$0xff] %vm103, %v1026
    %v1029 = vadd.f32 %v60, %v1025
    %v1030 = vadd.f32 %v61, %v1026
    %v1031 = vpack.c.bf16 %v1030, %v1029
    %v1032 = vpack.c.bf16 %v1026, %v1025
    %s1033 = scalar_lea.vmem %s3, 32
    %v1034 = vld [vmem:[%s1033] sm:$0xf]
    %v1035 = vld [vmem:[%s1033 + $0x4] sm:$0xf]
    %v1036 = vld [vmem:[%s1033 + $0x8] sm:$0xf]
    %v1037 = vld [vmem:[%s1033 + $0xc] sm:$0xf]
    %v1038 = vld [vmem:[%s1033 + $0x10] sm:$0xf]
    %v1039 = vld [vmem:[%s1033 + $0x14] sm:$0xf]
    %v1040 = vld [vmem:[%s1033 + $0x18] sm:$0xf]
    %v1041 = vld [vmem:[%s1033 + $0x1c] sm:$0xf]
    %s1042 = scalar_lea.vmem %s4, 1
    %v1043 = vld [vmem:[%s1042] sm:$0x1]
    %v1045 = vperm.slane %v1043, 0
    %v1055 = vunpack.c.l.b16 %v1034
    %v1056 = vunpack.c.l.b16 %v1035
    %v1057 = vunpack.c.l.b16 %v1036
    %v1058 = vunpack.c.l.b16 %v1037
    %v1059 = vunpack.c.l.b16 %v1038
    %v1060 = vunpack.c.l.b16 %v1039
    %v1061 = vunpack.c.l.b16 %v1040
    %v1062 = vunpack.c.l.b16 %v1041
    %v1063 = vpack.c.b16 %v1056, %v1055
    %v1064 = vpack.c.b16 %v1058, %v1057
    %v1065 = vpack.c.b16 %v1060, %v1059
    %v1066 = vpack.c.b16 %v1062, %v1061
    %v1072 = vsel %vm103, %v1031, 0
    %1074 = vmatpush.bf16.msra.mxu0 0
    %1075 = vmatpush.bf16.msra.mxu0 0
    %1076 = vmatpush.bf16.msra.mxu0 0
    %1077 = vmatpush.bf16.msra.mxu0 0
    %1078 = vmatpush.bf16.msra.mxu0 %v1066
    %1079 = vmatpush.bf16.msra.mxu0 %v1065
    %1080 = vmatpush.bf16.msra.mxu0 %v1064
    %1081 = vmatpush.bf16.msra.mxu0 %v1063
    %1082 = vmatmul.bf16.gmra.mxu0 %v1072
    %v1083 = vpop.f32.mrf.mxu0
    %v1084 = vadd.f32 %v1045, %v1083
    %v1085 = vpop.f32.mrf.mxu0
    %v1086 = vadd.f32 %v1045, %v1085
    %1087 = vdwg.mxu0
    %s1088 = scalar_lea.vmem %s5, 32
    %v1089 = vld [vmem:[%s1088] sm:$0xf]
    %v1090 = vld [vmem:[%s1088 + $0x4] sm:$0xf]
    %v1091 = vld [vmem:[%s1088 + $0x8] sm:$0xf]
    %v1092 = vld [vmem:[%s1088 + $0xc] sm:$0xf]
    %v1093 = vld [vmem:[%s1088 + $0x10] sm:$0xf]
    %v1094 = vld [vmem:[%s1088 + $0x14] sm:$0xf]
    %v1095 = vld [vmem:[%s1088 + $0x18] sm:$0xf]
    %v1096 = vld [vmem:[%s1088 + $0x1c] sm:$0xf]
    %s1097 = scalar_lea.vmem %s6, 1
    %v1098 = vld [vmem:[%s1097] sm:$0x1]
    %v1100 = vperm.slane %v1098, 0
    %v1110 = vunpack.c.l.b16 %v1089
    %v1111 = vunpack.c.l.b16 %v1090
    %v1112 = vunpack.c.l.b16 %v1091
    %v1113 = vunpack.c.l.b16 %v1092
    %v1114 = vunpack.c.l.b16 %v1093
    %v1115 = vunpack.c.l.b16 %v1094
    %v1116 = vunpack.c.l.b16 %v1095
    %v1117 = vunpack.c.l.b16 %v1096
    %v1118 = vpack.c.b16 %v1111, %v1110
    %v1119 = vpack.c.b16 %v1113, %v1112
    %v1120 = vpack.c.b16 %v1115, %v1114
    %v1121 = vpack.c.b16 %v1117, %v1116
    %v1127 = vsel %vm103, %v1032, 0
    %1129 = vmatpush.bf16.msra.mxu0 0
    %1130 = vmatpush.bf16.msra.mxu0 0
    %1131 = vmatpush.bf16.msra.mxu0 0
    %1132 = vmatpush.bf16.msra.mxu0 0
    %1133 = vmatpush.bf16.msra.mxu0 %v1121
    %1134 = vmatpush.bf16.msra.mxu0 %v1120
    %1135 = vmatpush.bf16.msra.mxu0 %v1119
    %1136 = vmatpush.bf16.msra.mxu0 %v1118
    %1137 = vmatmul.bf16.gmra.mxu0 %v1127
    %v1138 = vpop.f32.mrf.mxu0
    %v1139 = vadd.f32 %v1100, %v1138
    %v1140 = vpop.f32.mrf.mxu0
    %v1141 = vadd.f32 %v1100, %v1140
    %1142 = vdwg.mxu0
    %v1143 = vpack.c.bf16 %v1084, %v1084
    %v1144 = vpack.c.bf16 %v1086, %v1086
    %v1145 = vpack.c.bf16 %v1139, %v1139
    %v1146 = vpack.c.bf16 %v1141, %v1141
    %v1148 = vunpack.c.l.b16 %v1143
    %v1149 = vpack.c.b16 %v1148, %v1148
    %1150 = vrot.lane.b32.xlu0 %v1149, 64
    %v1151 = vpop.permute.xlu0 %1150
    %v1153 = vsel %vm183, %v1143, 0
    %v1156 = vsel %vm183, %v1151, 0
    %1158 = vmatpush.bf16.xpose.msra.mxu0 0
    %1159 = vmatpush.bf16.xpose.msra.mxu0 0
    %1160 = vmatpush.bf16.xpose.msra.mxu0 0
    %1161 = vmatpush.bf16.xpose.msra.mxu0 0
    %1162 = vmatpush.bf16.xpose.msra.mxu0 0
    %1163 = vmatpush.bf16.xpose.msra.mxu0 0
    %1164 = vmatpush.bf16.xpose.msra.mxu0 0
    %1165 = vmatpush.bf16.xpose.msra.mxu0 %v1156
    %1166 = vmatmul.bf16.gmra.mxu0 %v1153
    %v1167 = vpop.f32.mrf.mxu0
    %v1168 = vadd.f32 %v62, %v1167
    %v1169 = vpop.f32.mrf.mxu0
    %1170 = vdwg.mxu0
    %v1172 = vunpack.c.l.b16 %v1144
    %v1173 = vpack.c.b16 %v1172, %v1172
    %1174 = vrot.lane.b32.xlu0 %v1173, 64
    %v1175 = vpop.permute.xlu0 %1174
    %v1177 = vsel %vm183, %v1144, 0
    %v1180 = vsel %vm183, %v1175, 0
    %1182 = vmatpush.bf16.xpose.msra.mxu0 0
    %1183 = vmatpush.bf16.xpose.msra.mxu0 0
    %1184 = vmatpush.bf16.xpose.msra.mxu0 0
    %1185 = vmatpush.bf16.xpose.msra.mxu0 0
    %1186 = vmatpush.bf16.xpose.msra.mxu0 0
    %1187 = vmatpush.bf16.xpose.msra.mxu0 0
    %1188 = vmatpush.bf16.xpose.msra.mxu0 0
    %1189 = vmatpush.bf16.xpose.msra.mxu0 %v1180
    %1190 = vmatmul.bf16.gmra.mxu0 %v1177
    %v1191 = vpop.f32.mrf.mxu0
    %v1192 = vadd.f32 %v62, %v1191
    %v1193 = vpop.f32.mrf.mxu0
    %1194 = vdwg.mxu0
    %v1195 = vsel %vm227, %v1168, -inf
    %1196 = vmax.xlane.f32.xlu0 %v1195
    %v1197 = vpop.xlane.xlu0 %1196
    %v1198 = vsel %vm227, %v1192, -inf
    %1199 = vmax.xlane.f32.xlu0 %v1198
    %v1200 = vpop.xlane.xlu0 %1199
    %v1201 = vsub.f32 %v1168, %v1197
    %v1202 = vsub.f32 %v1192, %v1200
    %v1203 = vmul.f32 %v1201, 1.442695
    %v1204 = vpow.pop %v1203
    %v1205 = vmul.f32 %v1202, 1.442695
    %v1206 = vpow.pop %v1205
    %v1207 = vsel %vm227, %v1204, 0.0
    %1208 = vadd.xlane.f32.xlu0 %v1207
    %v1209 = vpop.xlane.xlu0 %1208
    %v1210 = vsel %vm227, %v1206, 0.0
    %1211 = vadd.xlane.f32.xlu0 %v1210
    %v1212 = vpop.xlane.xlu0 %1211
    %v1213 = vrcp.pop %v1209
    %v1214 = vrcp.pop %v1212
    %v1215 = vmul.f32 %v1204, %v1213
    %v1216 = vmul.f32 %v1206, %v1214
    %v1217 = vpack.c.bf16 %v1215, %v1215
    %v1218 = vpack.c.bf16 %v1216, %v1216
    %v1220 = vsel %vm227, %v1217, 0
    %v1223 = vsel %vm255, %v1145, 0
    %1225 = vmatpush.bf16.msra.mxu0 0
    %1226 = vmatpush.bf16.msra.mxu0 0
    %1227 = vmatpush.bf16.msra.mxu0 0
    %1228 = vmatpush.bf16.msra.mxu0 0
    %1229 = vmatpush.bf16.msra.mxu0 0
    %1230 = vmatpush.bf16.msra.mxu0 0
    %1231 = vmatpush.bf16.msra.mxu0 0
    %1232 = vmatpush.bf16.msra.mxu0 %v1223
    %1233 = vmatmul.bf16.gmra.mxu0 %v1220
    %v1234 = vpop.f32.mrf.mxu0
    %v1235 = vadd.f32 0.0, %v1234
    %v1236 = vpop.f32.mrf.mxu0
    %1237 = vdwg.mxu0
    %v1239 = vsel %vm227, %v1218, 0
    %v1242 = vsel %vm255, %v1146, 0
    %1244 = vmatpush.bf16.msra.mxu0 0
    %1245 = vmatpush.bf16.msra.mxu0 0
    %1246 = vmatpush.bf16.msra.mxu0 0
    %1247 = vmatpush.bf16.msra.mxu0 0
    %1248 = vmatpush.bf16.msra.mxu0 0
    %1249 = vmatpush.bf16.msra.mxu0 0
    %1250 = vmatpush.bf16.msra.mxu0 0
    %1251 = vmatpush.bf16.msra.mxu0 %v1242
    %1252 = vmatmul.bf16.gmra.mxu0 %v1239
    %v1253 = vpop.f32.mrf.mxu0
    %v1254 = vadd.f32 0.0, %v1253
    %v1255 = vpop.f32.mrf.mxu0
    %1256 = vdwg.mxu0
    %1257 = vrot.lane.b32.xlu0 %v1149, 96
    %v1258 = vpop.permute.xlu0 %1257
    %1259 = vrot.lane.b32.xlu0 %v1149, 32
    %v1260 = vpop.permute.xlu0 %1259
    %v1262 = vsel %vm183, %v1258, 0
    %v1265 = vsel %vm183, %v1260, 0
    %1267 = vmatpush.bf16.xpose.msra.mxu0 0
    %1268 = vmatpush.bf16.xpose.msra.mxu0 0
    %1269 = vmatpush.bf16.xpose.msra.mxu0 0
    %1270 = vmatpush.bf16.xpose.msra.mxu0 0
    %1271 = vmatpush.bf16.xpose.msra.mxu0 0
    %1272 = vmatpush.bf16.xpose.msra.mxu0 0
    %1273 = vmatpush.bf16.xpose.msra.mxu0 0
    %1274 = vmatpush.bf16.xpose.msra.mxu0 %v1265
    %1275 = vmatmul.bf16.gmra.mxu0 %v1262
    %v1276 = vpop.f32.mrf.mxu0
    %v1277 = vadd.f32 %v62, %v1276
    %v1278 = vpop.f32.mrf.mxu0
    %1279 = vdwg.mxu0
    %1280 = vrot.lane.b32.xlu0 %v1173, 96
    %v1281 = vpop.permute.xlu0 %1280
    %1282 = vrot.lane.b32.xlu0 %v1173, 32
    %v1283 = vpop.permute.xlu0 %1282
    %v1285 = vsel %vm183, %v1281, 0
    %v1288 = vsel %vm183, %v1283, 0
    %1290 = vmatpush.bf16.xpose.msra.mxu0 0
    %1291 = vmatpush.bf16.xpose.msra.mxu0 0
    %1292 = vmatpush.bf16.xpose.msra.mxu0 0
    %1293 = vmatpush.bf16.xpose.msra.mxu0 0
    %1294 = vmatpush.bf16.xpose.msra.mxu0 0
    %1295 = vmatpush.bf16.xpose.msra.mxu0 0
    %1296 = vmatpush.bf16.xpose.msra.mxu0 0
    %1297 = vmatpush.bf16.xpose.msra.mxu0 %v1288
    %1298 = vmatmul.bf16.gmra.mxu0 %v1285
    %v1299 = vpop.f32.mrf.mxu0
    %v1300 = vadd.f32 %v62, %v1299
    %v1301 = vpop.f32.mrf.mxu0
    %1302 = vdwg.mxu0
    %v1303 = vsel %vm227, %v1277, -inf
    %1304 = vmax.xlane.f32.xlu0 %v1303
    %v1305 = vpop.xlane.xlu0 %1304
    %v1306 = vsel %vm227, %v1300, -inf
    %1307 = vmax.xlane.f32.xlu0 %v1306
    %v1308 = vpop.xlane.xlu0 %1307
    %v1309 = vsub.f32 %v1277, %v1305
    %v1310 = vsub.f32 %v1300, %v1308
    %v1311 = vmul.f32 %v1309, 1.442695
    %v1312 = vpow.pop %v1311
    %v1313 = vmul.f32 %v1310, 1.442695
    %v1314 = vpow.pop %v1313
    %v1315 = vsel %vm227, %v1312, 0.0
    %1316 = vadd.xlane.f32.xlu0 %v1315
    %v1317 = vpop.xlane.xlu0 %1316
    %v1318 = vsel %vm227, %v1314, 0.0
    %1319 = vadd.xlane.f32.xlu0 %v1318
    %v1320 = vpop.xlane.xlu0 %1319
    %v1321 = vrcp.pop %v1317
    %v1322 = vrcp.pop %v1320
    %v1323 = vmul.f32 %v1312, %v1321
    %v1324 = vmul.f32 %v1314, %v1322
    %v1325 = vpack.c.bf16 %v1323, %v1323
    %v1326 = vpack.c.bf16 %v1324, %v1324
    %v1328 = vunpack.c.l.b16 %v1145
    %v1329 = vpack.c.b16 %v1328, %v1328
    %1330 = vrot.lane.b32.xlu0 %v1329, 96
    %v1331 = vpop.permute.xlu0 %1330
    %v1333 = vsel %vm227, %v1325, 0
    %v1336 = vsel %vm255, %v1331, 0
    %1338 = vmatpush.bf16.msra.mxu0 0
    %1339 = vmatpush.bf16.msra.mxu0 0
    %1340 = vmatpush.bf16.msra.mxu0 0
    %1341 = vmatpush.bf16.msra.mxu0 0
    %1342 = vmatpush.bf16.msra.mxu0 0
    %1343 = vmatpush.bf16.msra.mxu0 0
    %1344 = vmatpush.bf16.msra.mxu0 0
    %1345 = vmatpush.bf16.msra.mxu0 %v1336
    %1346 = vmatmul.bf16.gmra.mxu0 %v1333
    %v1347 = vpop.f32.mrf.mxu0
    %v1348 = vadd.f32 0.0, %v1347
    %v1349 = vpop.f32.mrf.mxu0
    %1350 = vdwg.mxu0
    %v1352 = vunpack.c.l.b16 %v1146
    %v1353 = vpack.c.b16 %v1352, %v1352
    %1354 = vrot.lane.b32.xlu0 %v1353, 96
    %v1355 = vpop.permute.xlu0 %1354
    %v1357 = vsel %vm227, %v1326, 0
    %v1360 = vsel %vm255, %v1355, 0
    %1362 = vmatpush.bf16.msra.mxu0 0
    %1363 = vmatpush.bf16.msra.mxu0 0
    %1364 = vmatpush.bf16.msra.mxu0 0
    %1365 = vmatpush.bf16.msra.mxu0 0
    %1366 = vmatpush.bf16.msra.mxu0 0
    %1367 = vmatpush.bf16.msra.mxu0 0
    %1368 = vmatpush.bf16.msra.mxu0 0
    %1369 = vmatpush.bf16.msra.mxu0 %v1360
    %1370 = vmatmul.bf16.gmra.mxu0 %v1357
    %v1371 = vpop.f32.mrf.mxu0
    %v1372 = vadd.f32 0.0, %v1371
    %v1373 = vpop.f32.mrf.mxu0
    %1374 = vdwg.mxu0
    %1377 = vrot.lane.b32.xlu0 %v1348, 32
    %v1378 = vpop.permute.xlu0 %1377
    %1379 = vrot.lane.b32.xlu0 %v1372, 32
    %v1380 = vpop.permute.xlu0 %1379
    %v1383 = vsel %vm183, %v1235, %v1378
    %v1384 = vsel %vm183, %v1254, %v1380
    %v1385 = vpack.c.bf16 %v1384, %v1383
    %s1386 = scalar_lea.vmem %s7, 32
    %v1387 = vld [vmem:[%s1386] sm:$0xf]
    %v1388 = vld [vmem:[%s1386 + $0x4] sm:$0xf]
    %v1389 = vld [vmem:[%s1386 + $0x8] sm:$0xf]
    %v1390 = vld [vmem:[%s1386 + $0xc] sm:$0xf]
    %v1391 = vld [vmem:[%s1386 + $0x10] sm:$0xf]
    %v1392 = vld [vmem:[%s1386 + $0x14] sm:$0xf]
    %v1393 = vld [vmem:[%s1386 + $0x18] sm:$0xf]
    %v1394 = vld [vmem:[%s1386 + $0x1c] sm:$0xf]
    %s1395 = scalar_lea.vmem %s8, 1
    %v1396 = vld [vmem:[%s1395] sm:$0x1]
    %v1398 = vperm.slane %v1396, 0
    %v1408 = vunpack.c.l.b16 %v1387
    %v1409 = vunpack.c.l.b16 %v1388
    %v1410 = vunpack.c.l.b16 %v1389
    %v1411 = vunpack.c.l.b16 %v1390
    %v1412 = vunpack.c.l.b16 %v1391
    %v1413 = vunpack.c.l.b16 %v1392
    %v1414 = vunpack.c.l.b16 %v1393
    %v1415 = vunpack.c.l.b16 %v1394
    %v1416 = vpack.c.b16 %v1409, %v1408
    %v1417 = vpack.c.b16 %v1411, %v1410
    %v1418 = vpack.c.b16 %v1413, %v1412
    %v1419 = vpack.c.b16 %v1415, %v1414
    %v1425 = vsel %vm103, %v1385, 0
    %1427 = vmatpush.bf16.msra.mxu0 0
    %1428 = vmatpush.bf16.msra.mxu0 0
    %1429 = vmatpush.bf16.msra.mxu0 0
    %1430 = vmatpush.bf16.msra.mxu0 0
    %1431 = vmatpush.bf16.msra.mxu0 %v1419
    %1432 = vmatpush.bf16.msra.mxu0 %v1418
    %1433 = vmatpush.bf16.msra.mxu0 %v1417
    %1434 = vmatpush.bf16.msra.mxu0 %v1416
    %1435 = vmatmul.bf16.gmra.mxu0 %v1425
    %v1436 = vpop.f32.mrf.mxu0
    %v1437 = vadd.f32 %v1398, %v1436
    %v1438 = vpop.f32.mrf.mxu0
    %v1439 = vadd.f32 %v1398, %v1438
    %1440 = vdwg.mxu0
    %v1441 = vadd.f32 %v1437, %v1025
    %v1442 = vadd.f32 %v1439, %v1026
    %s1443 = scalar_lea.vmem %s9, 1
    %v1444 = vld [vmem:[%s1443] sm:$0x1]
    %s1445 = scalar_lea.vmem %s10, 1
    %v1446 = vld [vmem:[%s1445] sm:$0x1]
    %v1447 = vsel %vm103, %v1441, 0.0
    %1448 = vadd.xlane.f32.xlu0 %v1447
    %v1449 = vpop.xlane.xlu0 %1448
    %v1450 = vsel %vm103, %v1442, 0.0
    %1451 = vadd.xlane.f32.xlu0 %v1450
    %v1452 = vpop.xlane.xlu0 %1451
    %v1453 = vmul.f32 %v1449, %v489
    %v1454 = vmul.f32 %v1452, %v489
    %v1455 = vsub.f32 %v1441, %v1453
    %v1456 = vsub.f32 %v1442, %v1454
    %v1457 = vmul.f32 %v1455, %v1455
    %v1458 = vmul.f32 %v1456, %v1456
    %v1459 = vsel %vm103, %v1457, 0.0
    %1460 = vadd.xlane.f32.xlu0 %v1459
    %v1461 = vpop.xlane.xlu0 %1460
    %v1462 = vsel %vm103, %v1458, 0.0
    %1463 = vadd.xlane.f32.xlu0 %v1462
    %v1464 = vpop.xlane.xlu0 %1463
    %v1465 = vmul.f32 %v1461, %v489
    %v1466 = vmul.f32 %v1464, %v489
    %v1467 = vadd.f32 %v1465, 1e-12
    %v1468 = vadd.f32 %v1466, 1e-12
    %v1469 = vrsqrt.pop %v1467
    %v1470 = vmul.f32 %v1469, %v1467
    %v1471 = vmul.f32 %v1470, %v1469
    %v1472 = vmul.f32 0.5, %v1471
    %v1473 = vsub.f32 1.5, %v1472
    %v1474 = vmul.f32 %v1469, %v1473
    %vm1475 = vweird.f32 %v1467
    %vm1476 = vweird.f32 %v1469
    %vm1477 = vmor %vm1475, %vm1476
    %v1478 = vsel %vm1477, %v1469, %v1474
    %v1479 = vrsqrt.pop %v1468
    %v1480 = vmul.f32 %v1479, %v1468
    %v1481 = vmul.f32 %v1480, %v1479
    %v1482 = vmul.f32 0.5, %v1481
    %v1483 = vsub.f32 1.5, %v1482
    %v1484 = vmul.f32 %v1479, %v1483
    %vm1485 = vweird.f32 %v1468
    %vm1486 = vweird.f32 %v1479
    %vm1487 = vmor %vm1485, %vm1486
    %v1488 = vsel %vm1487, %v1479, %v1484
    %v1489 = vmul.f32 %v1455, %v1478
    %v1490 = vmul.f32 %v1456, %v1488
    %v1492 = vperm.slane %v1444, 0
    %v1494 = vmul.f32 %v1489, %v1492
    %v1495 = vmul.f32 %v1490, %v1492
    %v1497 = vperm.slane %v1446, 0
    %v1499 = vadd.f32 %v1494, %v1497
    %v1500 = vadd.f32 %v1495, %v1497
    %v1501 = vpack.c.bf16 %v1500, %v1499
    %s1502 = scalar_lea.vmem %s11, 64
    %v1503 = vld [vmem:[%s1502] sm:$0xff]
    %v1504 = vld [vmem:[%s1502 + $0x8] sm:$0xff]
    %v1505 = vld [vmem:[%s1502 + $0x10] sm:$0xff]
    %v1506 = vld [vmem:[%s1502 + $0x18] sm:$0xff]
    %v1507 = vld [vmem:[%s1502 + $0x20] sm:$0xff]
    %v1508 = vld [vmem:[%s1502 + $0x28] sm:$0xff]
    %v1509 = vld [vmem:[%s1502 + $0x30] sm:$0xff]
    %v1510 = vld [vmem:[%s1502 + $0x38] sm:$0xff]
    %s1511 = scalar_lea.vmem %s12, 2
    %v1512 = vld [vmem:[%s1511] sm:$0x3]
    %v1514 = vperm.slane %v1512, 0
    %v1515 = vperm.slane %v1512, 1
    %v1526 = vunpack.c.l.b16 %v1503
    %v1527 = vunpack.c.h.b16 %v1503
    %v1528 = vunpack.c.l.b16 %v1504
    %v1529 = vunpack.c.h.b16 %v1504
    %v1530 = vunpack.c.l.b16 %v1505
    %v1531 = vunpack.c.h.b16 %v1505
    %v1532 = vunpack.c.l.b16 %v1506
    %v1533 = vunpack.c.h.b16 %v1506
    %v1534 = vunpack.c.l.b16 %v1507
    %v1535 = vunpack.c.h.b16 %v1507
    %v1536 = vunpack.c.l.b16 %v1508
    %v1537 = vunpack.c.h.b16 %v1508
    %v1538 = vunpack.c.l.b16 %v1509
    %v1539 = vunpack.c.h.b16 %v1509
    %v1540 = vunpack.c.l.b16 %v1510
    %v1541 = vunpack.c.h.b16 %v1510
    %v1542 = vpack.c.b16 %v1528, %v1526
    %v1543 = vpack.c.b16 %v1529, %v1527
    %v1544 = vpack.c.b16 %v1532, %v1530
    %v1545 = vpack.c.b16 %v1533, %v1531
    %v1546 = vpack.c.b16 %v1536, %v1534
    %v1547 = vpack.c.b16 %v1537, %v1535
    %v1548 = vpack.c.b16 %v1540, %v1538
    %v1549 = vpack.c.b16 %v1541, %v1539
    %v1559 = vsel %vm103, %v1501, 0
    %1561 = vmatpush.bf16.msra.mxu0 0
    %1562 = vmatpush.bf16.msra.mxu0 0
    %1563 = vmatpush.bf16.msra.mxu0 0
    %1564 = vmatpush.bf16.msra.mxu0 0
    %1565 = vmatpush.bf16.msra.mxu0 %v1548
    %1566 = vmatpush.bf16.msra.mxu0 %v1546
    %1567 = vmatpush.bf16.msra.mxu0 %v1544
    %1568 = vmatpush.bf16.msra.mxu0 %v1542
    %1569 = vmatmul.bf16.gmra.mxu0 %v1559
    %v1570 = vpop.f32.mrf.mxu0
    %v1571 = vadd.f32 %v1514, %v1570
    %v1572 = vpop.f32.mrf.mxu0
    %v1573 = vadd.f32 %v1514, %v1572
    %1574 = vdwg.mxu0
    %1575 = vmatpush.bf16.msra.mxu0 0
    %1576 = vmatpush.bf16.msra.mxu0 0
    %1577 = vmatpush.bf16.msra.mxu0 0
    %1578 = vmatpush.bf16.msra.mxu0 0
    %1579 = vmatpush.bf16.msra.mxu0 %v1549
    %1580 = vmatpush.bf16.msra.mxu0 %v1547
    %1581 = vmatpush.bf16.msra.mxu0 %v1545
    %1582 = vmatpush.bf16.msra.mxu0 %v1543
    %1583 = vmatmul.bf16.gmra.mxu0 %v1559
    %v1584 = vpop.f32.mrf.mxu0
    %v1585 = vadd.f32 %v1515, %v1584
    %v1586 = vpop.f32.mrf.mxu0
    %v1587 = vadd.f32 %v1515, %v1586
    %1588 = vdwg.mxu0
    %v1589 = vmul.f32 %v1571, 0.5
    %v1590 = vmul.f32 %v1585, 0.5
    %v1591 = vmul.f32 %v1573, 0.5
    %v1592 = vmul.f32 %v1587, 0.5
    %v1593 = vmul.f32 %v1571, %v634
    %v1594 = vmul.f32 %v1585, %v634
    %v1595 = vmul.f32 %v1573, %v634
    %v1596 = vmul.f32 %v1587, %v634
    %v1597 = vmul.f32 %v1593, %v1593
    %v1598 = vmin.f32 16.0, %v1597
    %v1599 = vmul.f32 %v1598, 2.1237322e-06
    %v1600 = vadd.f32 %v1599, 0.00028619796
    %v1601 = vmul.f32 %v1598, %v1600
    %v1602 = vadd.f32 %v1601, 0.0036580483
    %v1603 = vmul.f32 %v1598, %v1602
    %v1604 = vadd.f32 %v1603, 0.05243302
    %v1605 = vmul.f32 %v1598, %v1604
    %v1606 = vadd.f32 %v1605, 0.18741608
    %v1607 = vmul.f32 %v1598, %v1606
    %v1608 = vadd.f32 %v1607, 1.1283791
    %v1609 = vmul.f32 %v1593, %v1608
    %v1610 = vmul.f32 %v1598, 3.8918573e-05
    %v1611 = vadd.f32 %v1610, 0.001143296
    %v1612 = vmul.f32 %v1598, %v1611
    %v1613 = vadd.f32 %v1612, 0.014752088
    %v1614 = vmul.f32 %v1598, %v1613
    %v1615 = vadd.f32 %v1614, 0.112945676
    %v1616 = vmul.f32 %v1598, %v1615
    %v1617 = vadd.f32 %v1616, 0.4994258
    %v1618 = vmul.f32 %v1598, %v1617
    %v1619 = vadd.f32 %v1618, 1.0
    %v1620 = vrcp.pop %v1619
    %v1621 = vmul.f32 %v1619, %v1620
    %v1622 = vsub.f32 1.0, %v1621
    %v1623 = vmul.f32 %v1620, %v1622
    %v1624 = vadd.f32 %v1620, %v1623
    %vm1625 = vweird.f32 %v1619
    %vm1626 = vweird.f32 %v1620
    %vm1627 = vmor %vm1625, %vm1626
    %v1628 = vsel %vm1627, %v1620, %v1624
    %v1629 = vand.u32 2147483647, %v1619
    %vm1630 = vcmp.eq.f32.partialorder %v1629, 8.507059e+37
    %v1631 = vand.u32 %v1619, 2147483648
    %v1632 = vor.u32 1.1754944e-38, %v1631
    %v1633 = vsel %vm1630, %v1632, %v1628
    %v1634 = vmul.f32 %v1609, %v1633
    %v1635 = vmin.f32 %v1634, 1.0
    %v1636 = vmax.f32 %v1635, -1.0
    %v1637 = vmul.f32 %v1594, %v1594
    %v1638 = vmin.f32 16.0, %v1637
    %v1639 = vmul.f32 %v1638, 2.1237322e-06
    %v1640 = vadd.f32 %v1639, 0.00028619796
    %v1641 = vmul.f32 %v1638, %v1640
    %v1642 = vadd.f32 %v1641, 0.0036580483
    %v1643 = vmul.f32 %v1638, %v1642
    %v1644 = vadd.f32 %v1643, 0.05243302
    %v1645 = vmul.f32 %v1638, %v1644
    %v1646 = vadd.f32 %v1645, 0.18741608
    %v1647 = vmul.f32 %v1638, %v1646
    %v1648 = vadd.f32 %v1647, 1.1283791
    %v1649 = vmul.f32 %v1594, %v1648
    %v1650 = vmul.f32 %v1638, 3.8918573e-05
    %v1651 = vadd.f32 %v1650, 0.001143296
    %v1652 = vmul.f32 %v1638, %v1651
    %v1653 = vadd.f32 %v1652, 0.014752088
    %v1654 = vmul.f32 %v1638, %v1653
    %v1655 = vadd.f32 %v1654, 0.112945676
    %v1656 = vmul.f32 %v1638, %v1655
    %v1657 = vadd.f32 %v1656, 0.4994258
    %v1658 = vmul.f32 %v1638, %v1657
    %v1659 = vadd.f32 %v1658, 1.0
    %v1660 = vrcp.pop %v1659
    %v1661 = vmul.f32 %v1659, %v1660
    %v1662 = vsub.f32 1.0, %v1661
    %v1663 = vmul.f32 %v1660, %v1662
    %v1664 = vadd.f32 %v1660, %v1663
    %vm1665 = vweird.f32 %v1659
    %vm1666 = vweird.f32 %v1660
    %vm1667 = vmor %vm1665, %vm1666
    %v1668 = vsel %vm1667, %v1660, %v1664
    %v1669 = vand.u32 2147483647, %v1659
    %vm1670 = vcmp.eq.f32.partialorder %v1669, 8.507059e+37
    %v1671 = vand.u32 %v1659, 2147483648
    %v1672 = vor.u32 1.1754944e-38, %v1671
    %v1673 = vsel %vm1670, %v1672, %v1668
    %v1674 = vmul.f32 %v1649, %v1673
    %v1675 = vmin.f32 %v1674, 1.0
    %v1676 = vmax.f32 %v1675, -1.0
    %v1677 = vmul.f32 %v1595, %v1595
    %v1678 = vmin.f32 16.0, %v1677
    %v1679 = vmul.f32 %v1678, 2.1237322e-06
    %v1680 = vadd.f32 %v1679, 0.00028619796
    %v1681 = vmul.f32 %v1678, %v1680
    %v1682 = vadd.f32 %v1681, 0.0036580483
    %v1683 = vmul.f32 %v1678, %v1682
    %v1684 = vadd.f32 %v1683, 0.05243302
    %v1685 = vmul.f32 %v1678, %v1684
    %v1686 = vadd.f32 %v1685, 0.18741608
    %v1687 = vmul.f32 %v1678, %v1686
    %v1688 = vadd.f32 %v1687, 1.1283791
    %v1689 = vmul.f32 %v1595, %v1688
    %v1690 = vmul.f32 %v1678, 3.8918573e-05
    %v1691 = vadd.f32 %v1690, 0.001143296
    %v1692 = vmul.f32 %v1678, %v1691
    %v1693 = vadd.f32 %v1692, 0.014752088
    %v1694 = vmul.f32 %v1678, %v1693
    %v1695 = vadd.f32 %v1694, 0.112945676
    %v1696 = vmul.f32 %v1678, %v1695
    %v1697 = vadd.f32 %v1696, 0.4994258
    %v1698 = vmul.f32 %v1678, %v1697
    %v1699 = vadd.f32 %v1698, 1.0
    %v1700 = vrcp.pop %v1699
    %v1701 = vmul.f32 %v1699, %v1700
    %v1702 = vsub.f32 1.0, %v1701
    %v1703 = vmul.f32 %v1700, %v1702
    %v1704 = vadd.f32 %v1700, %v1703
    %vm1705 = vweird.f32 %v1699
    %vm1706 = vweird.f32 %v1700
    %vm1707 = vmor %vm1705, %vm1706
    %v1708 = vsel %vm1707, %v1700, %v1704
    %v1709 = vand.u32 2147483647, %v1699
    %vm1710 = vcmp.eq.f32.partialorder %v1709, 8.507059e+37
    %v1711 = vand.u32 %v1699, 2147483648
    %v1712 = vor.u32 1.1754944e-38, %v1711
    %v1713 = vsel %vm1710, %v1712, %v1708
    %v1714 = vmul.f32 %v1689, %v1713
    %v1715 = vmin.f32 %v1714, 1.0
    %v1716 = vmax.f32 %v1715, -1.0
    %v1717 = vmul.f32 %v1596, %v1596
    %v1718 = vmin.f32 16.0, %v1717
    %v1719 = vmul.f32 %v1718, 2.1237322e-06
    %v1720 = vadd.f32 %v1719, 0.00028619796
    %v1721 = vmul.f32 %v1718, %v1720
    %v1722 = vadd.f32 %v1721, 0.0036580483
    %v1723 = vmul.f32 %v1718, %v1722
    %v1724 = vadd.f32 %v1723, 0.05243302
    %v1725 = vmul.f32 %v1718, %v1724
    %v1726 = vadd.f32 %v1725, 0.18741608
    %v1727 = vmul.f32 %v1718, %v1726
    %v1728 = vadd.f32 %v1727, 1.1283791
    %v1729 = vmul.f32 %v1596, %v1728
    %v1730 = vmul.f32 %v1718, 3.8918573e-05
    %v1731 = vadd.f32 %v1730, 0.001143296
    %v1732 = vmul.f32 %v1718, %v1731
    %v1733 = vadd.f32 %v1732, 0.014752088
    %v1734 = vmul.f32 %v1718, %v1733
    %v1735 = vadd.f32 %v1734, 0.112945676
    %v1736 = vmul.f32 %v1718, %v1735
    %v1737 = vadd.f32 %v1736, 0.4994258
    %v1738 = vmul.f32 %v1718, %v1737
    %v1739 = vadd.f32 %v1738, 1.0
    %v1740 = vrcp.pop %v1739
    %v1741 = vmul.f32 %v1739, %v1740
    %v1742 = vsub.f32 1.0, %v1741
    %v1743 = vmul.f32 %v1740, %v1742
    %v1744 = vadd.f32 %v1740, %v1743
    %vm1745 = vweird.f32 %v1739
    %vm1746 = vweird.f32 %v1740
    %vm1747 = vmor %vm1745, %vm1746
    %v1748 = vsel %vm1747, %v1740, %v1744
    %v1749 = vand.u32 2147483647, %v1739
    %vm1750 = vcmp.eq.f32.partialorder %v1749, 8.507059e+37
    %v1751 = vand.u32 %v1739, 2147483648
    %v1752 = vor.u32 1.1754944e-38, %v1751
    %v1753 = vsel %vm1750, %v1752, %v1748
    %v1754 = vmul.f32 %v1729, %v1753
    %v1755 = vmin.f32 %v1754, 1.0
    %v1756 = vmax.f32 %v1755, -1.0
    %v1757 = vadd.f32 %v1636, 1.0
    %v1758 = vadd.f32 %v1676, 1.0
    %v1759 = vadd.f32 %v1716, 1.0
    %v1760 = vadd.f32 %v1756, 1.0
    %v1761 = vmul.f32 %v1589, %v1757
    %v1762 = vmul.f32 %v1590, %v1758
    %v1763 = vmul.f32 %v1591, %v1759
    %v1764 = vmul.f32 %v1592, %v1760
    %v1765 = vpack.c.bf16 %v1763, %v1761
    %v1766 = vpack.c.bf16 %v1764, %v1762
    %s1767 = scalar_lea.vmem %s13, 128
    %v1768 = vld [vmem:[%s1767] sm:$0xf]
    %v1769 = vld [vmem:[%s1767 + $0x4] sm:$0xf]
    %v1770 = vld [vmem:[%s1767 + $0x8] sm:$0xf]
    %v1771 = vld [vmem:[%s1767 + $0xc] sm:$0xf]
    %v1772 = vld [vmem:[%s1767 + $0x10] sm:$0xf]
    %v1773 = vld [vmem:[%s1767 + $0x14] sm:$0xf]
    %v1774 = vld [vmem:[%s1767 + $0x18] sm:$0xf]
    %v1775 = vld [vmem:[%s1767 + $0x1c] sm:$0xf]
    %v1776 = vld [vmem:[%s1767 + $0x20] sm:$0xf]
    %v1777 = vld [vmem:[%s1767 + $0x24] sm:$0xf]
    %v1778 = vld [vmem:[%s1767 + $0x28] sm:$0xf]
    %v1779 = vld [vmem:[%s1767 + $0x2c] sm:$0xf]
    %v1780 = vld [vmem:[%s1767 + $0x30] sm:$0xf]
    %v1781 = vld [vmem:[%s1767 + $0x34] sm:$0xf]
    %v1782 = vld [vmem:[%s1767 + $0x38] sm:$0xf]
    %v1783 = vld [vmem:[%s1767 + $0x3c] sm:$0xf]
    %v1784 = vld [vmem:[%s1767 + $0x40] sm:$0xf]
    %v1785 = vld [vmem:[%s1767 + $0x44] sm:$0xf]
    %v1786 = vld [vmem:[%s1767 + $0x48] sm:$0xf]
    %v1787 = vld [vmem:[%s1767 + $0x4c] sm:$0xf]
    %v1788 = vld [vmem:[%s1767 + $0x50] sm:$0xf]
    %v1789 = vld [vmem:[%s1767 + $0x54] sm:$0xf]
    %v1790 = vld [vmem:[%s1767 + $0x58] sm:$0xf]
    %v1791 = vld [vmem:[%s1767 + $0x5c] sm:$0xf]
    %v1792 = vld [vmem:[%s1767 + $0x60] sm:$0xf]
    %v1793 = vld [vmem:[%s1767 + $0x64] sm:$0xf]
    %v1794 = vld [vmem:[%s1767 + $0x68] sm:$0xf]
    %v1795 = vld [vmem:[%s1767 + $0x6c] sm:$0xf]
    %v1796 = vld [vmem:[%s1767 + $0x70] sm:$0xf]
    %v1797 = vld [vmem:[%s1767 + $0x74] sm:$0xf]
    %v1798 = vld [vmem:[%s1767 + $0x78] sm:$0xf]
    %v1799 = vld [vmem:[%s1767 + $0x7c] sm:$0xf]
    %s1800 = scalar_lea.vmem %s14, 1
    %v1801 = vld [vmem:[%s1800] sm:$0x1]
    %v1803 = vperm.slane %v1801, 0
    %v1837 = vunpack.c.l.b16 %v1768
    %v1838 = vunpack.c.l.b16 %v1769
    %v1839 = vunpack.c.l.b16 %v1770
    %v1840 = vunpack.c.l.b16 %v1771
    %v1841 = vunpack.c.l.b16 %v1772
    %v1842 = vunpack.c.l.b16 %v1773
    %v1843 = vunpack.c.l.b16 %v1774
    %v1844 = vunpack.c.l.b16 %v1775
    %v1845 = vunpack.c.l.b16 %v1776
    %v1846 = vunpack.c.l.b16 %v1777
    %v1847 = vunpack.c.l.b16 %v1778
    %v1848 = vunpack.c.l.b16 %v1779
    %v1849 = vunpack.c.l.b16 %v1780
    %v1850 = vunpack.c.l.b16 %v1781
    %v1851 = vunpack.c.l.b16 %v1782
    %v1852 = vunpack.c.l.b16 %v1783
    %v1853 = vunpack.c.l.b16 %v1784
    %v1854 = vunpack.c.l.b16 %v1785
    %v1855 = vunpack.c.l.b16 %v1786
    %v1856 = vunpack.c.l.b16 %v1787
    %v1857 = vunpack.c.l.b16 %v1788
    %v1858 = vunpack.c.l.b16 %v1789
    %v1859 = vunpack.c.l.b16 %v1790
    %v1860 = vunpack.c.l.b16 %v1791
    %v1861 = vunpack.c.l.b16 %v1792
    %v1862 = vunpack.c.l.b16 %v1793
    %v1863 = vunpack.c.l.b16 %v1794
    %v1864 = vunpack.c.l.b16 %v1795
    %v1865 = vunpack.c.l.b16 %v1796
    %v1866 = vunpack.c.l.b16 %v1797
    %v1867 = vunpack.c.l.b16 %v1798
    %v1868 = vunpack.c.l.b16 %v1799
    %v1869 = vpack.c.b16 %v1838, %v1837
    %v1870 = vpack.c.b16 %v1840, %v1839
    %v1871 = vpack.c.b16 %v1842, %v1841
    %v1872 = vpack.c.b16 %v1844, %v1843
    %v1873 = vpack.c.b16 %v1846, %v1845
    %v1874 = vpack.c.b16 %v1848, %v1847
    %v1875 = vpack.c.b16 %v1850, %v1849
    %v1876 = vpack.c.b16 %v1852, %v1851
    %v1877 = vpack.c.b16 %v1854, %v1853
    %v1878 = vpack.c.b16 %v1856, %v1855
    %v1879 = vpack.c.b16 %v1858, %v1857
    %v1880 = vpack.c.b16 %v1860, %v1859
    %v1881 = vpack.c.b16 %v1862, %v1861
    %v1882 = vpack.c.b16 %v1864, %v1863
    %v1883 = vpack.c.b16 %v1866, %v1865
    %v1884 = vpack.c.b16 %v1868, %v1867
    %1901 = vmatpush.bf16.msra.mxu0 %v1876
    %1902 = vmatpush.bf16.msra.mxu0 %v1875
    %1903 = vmatpush.bf16.msra.mxu0 %v1874
    %1904 = vmatpush.bf16.msra.mxu0 %v1873
    %1905 = vmatpush.bf16.msra.mxu0 %v1872
    %1906 = vmatpush.bf16.msra.mxu0 %v1871
    %1907 = vmatpush.bf16.msra.mxu0 %v1870
    %1908 = vmatpush.bf16.msra.mxu0 %v1869
    %1909 = vmatmul.bf16.gmra.mxu0 %v1765
    %v1910 = vpop.f32.mrf.mxu0
    %v1911 = vadd.f32 %v1803, %v1910
    %v1912 = vpop.f32.mrf.mxu0
    %v1913 = vadd.f32 %v1803, %v1912
    %1914 = vdwg.mxu0
    %1915 = vmatpush.bf16.msra.mxu0 %v1884
    %1916 = vmatpush.bf16.msra.mxu0 %v1883
    %1917 = vmatpush.bf16.msra.mxu0 %v1882
    %1918 = vmatpush.bf16.msra.mxu0 %v1881
    %1919 = vmatpush.bf16.msra.mxu0 %v1880
    %1920 = vmatpush.bf16.msra.mxu0 %v1879
    %1921 = vmatpush.bf16.msra.mxu0 %v1878
    %1922 = vmatpush.bf16.msra.mxu0 %v1877
    %1923 = vmatmul.bf16.gmra.mxu0 %v1766
    %v1924 = vpop.f32.mrf.mxu0
    %v1925 = vadd.f32 %v1911, %v1924
    %v1926 = vpop.f32.mrf.mxu0
    %v1927 = vadd.f32 %v1913, %v1926
    %1928 = vdwg.mxu0
    %v1929 = vadd.f32 %v1925, %v1499
    %v1930 = vadd.f32 %v1927, %v1500
    %s1931 = scalar_lea.vmem %s15, 1
    %v1932 = vld [vmem:[%s1931] sm:$0x1]
    %s1933 = scalar_lea.vmem %s16, 1
    %v1934 = vld [vmem:[%s1933] sm:$0x1]
    %v1935 = vsel %vm103, %v1929, 0.0
    %1936 = vadd.xlane.f32.xlu0 %v1935
    %v1937 = vpop.xlane.xlu0 %1936
    %v1938 = vsel %vm103, %v1930, 0.0
    %1939 = vadd.xlane.f32.xlu0 %v1938
    %v1940 = vpop.xlane.xlu0 %1939
    %v1941 = vmul.f32 %v1937, %v489
    %v1942 = vmul.f32 %v1940, %v489
    %v1943 = vsub.f32 %v1929, %v1941
    %v1944 = vsub.f32 %v1930, %v1942
    %v1945 = vmul.f32 %v1943, %v1943
    %v1946 = vmul.f32 %v1944, %v1944
    %v1947 = vsel %vm103, %v1945, 0.0
    %1948 = vadd.xlane.f32.xlu0 %v1947
    %v1949 = vpop.xlane.xlu0 %1948
    %v1950 = vsel %vm103, %v1946, 0.0
    %1951 = vadd.xlane.f32.xlu0 %v1950
    %v1952 = vpop.xlane.xlu0 %1951
    %v1953 = vmul.f32 %v1949, %v489
    %v1954 = vmul.f32 %v1952, %v489
    %v1955 = vadd.f32 %v1953, 1e-12
    %v1956 = vadd.f32 %v1954, 1e-12
    %v1957 = vrsqrt.pop %v1955
    %v1958 = vmul.f32 %v1957, %v1955
    %v1959 = vmul.f32 %v1958, %v1957
    %v1960 = vmul.f32 0.5, %v1959
    %v1961 = vsub.f32 1.5, %v1960
    %v1962 = vmul.f32 %v1957, %v1961
    %vm1963 = vweird.f32 %v1955
    %vm1964 = vweird.f32 %v1957
    %vm1965 = vmor %vm1963, %vm1964
    %v1966 = vsel %vm1965, %v1957, %v1962
    %v1967 = vrsqrt.pop %v1956
    %v1968 = vmul.f32 %v1967, %v1956
    %v1969 = vmul.f32 %v1968, %v1967
    %v1970 = vmul.f32 0.5, %v1969
    %v1971 = vsub.f32 1.5, %v1970
    %v1972 = vmul.f32 %v1967, %v1971
    %vm1973 = vweird.f32 %v1956
    %vm1974 = vweird.f32 %v1967
    %vm1975 = vmor %vm1973, %vm1974
    %v1976 = vsel %vm1975, %v1967, %v1972
    %v1977 = vmul.f32 %v1943, %v1966
    %v1978 = vmul.f32 %v1944, %v1976
    %v1980 = vperm.slane %v1932, 0
    %v1982 = vmul.f32 %v1977, %v1980
    %v1983 = vmul.f32 %v1978, %v1980
    %v1985 = vperm.slane %v1934, 0
    %v1987 = vadd.f32 %v1982, %v1985
    %v1988 = vadd.f32 %v1983, %v1985
    %s1989 = scalar_lea.vmem [#allocation2], 16
    %1990 = vst.msk [vmem:[%s1989] sm:$0xff] %vm103, %v1987
    %1991 = vst.msk [vmem:[%s1989 + $0x8] sm:$0xff] %vm103, %v1988
    // Predicated region
    $region70: #{tpu_custom_call.1} parent=1 // pred_check
      _
    $region71: #{tpu_custom_call.1} parent=1 // pred_check_branch
      %1993 = sbr.rel (0) target = $region73
    $region72: #{tpu_custom_call.1} parent=1 // pred_region
      %1995 = vsyncadd [#allocation3], 0
      %s1996 = sshll.u32 [#allocation2], 4
      %s1997 = int_to_ptr.vmem [resolvable:$true] %s1996
      %s1998 = sshll.u32 %s17, 4
      %s1999 = int_to_ptr.hbm [resolvable:$true] %s1998
      %2004 = dma.vmem_to_hbm [thread:$0]  %s1997, 512, %s1999, [#allocation3], 128, 128, 8
    $region73: #{tpu_custom_call.1} parent=1 // pred_fallthru
      _
    // Predicated region
    $region74: #{tpu_custom_call.1} parent=1 // pred_check
      _
    $region75: #{tpu_custom_call.1} parent=1 // pred_check_branch
      %2006 = sbr.rel (0) target = $region77
    $region76: #{tpu_custom_call.1} parent=1 // pred_region
      %2008 = dma.done [#allocation3], 512
    $region77: #{tpu_custom_call.1} parent=1 // pred_fallthru
      _
    %2009 = vsyncpa [#allocation3], 1

</llo_original>
